<compile_context>
chip_gen: v6e
topology: v6e:2x2x1
jax: 0.10.0
libtpu: 0.0.40
codegen_flags: <defaults>
</compile_context>

<pallas_src>
import functools

import jax
import jax.numpy as jnp
from jax.experimental import pallas as pl
from jax.experimental.pallas import tpu as pltpu


# ----------------------------------------------------------------------------
# helpers
# ----------------------------------------------------------------------------
def _pick_row_tile(total_rows, bytes_per_row, unit, max_bytes):
    """Largest divisor of total_rows that is a multiple of `unit` and fits in
    max_bytes.  If none fits the cap, the smallest legal divisor (avoids VMEM
    blow-ups); if no legal divisor exists, the full extent."""
    if total_rows * bytes_per_row <= max_bytes or total_rows <= unit:
        return total_rows
    divisors = [r for r in range(unit, total_rows, unit) if total_rows % r == 0]
    if not divisors:
        # TODO(synk): pad H to a friendlier size for awkward factorizations.
        return total_rows
    fitting = [r for r in divisors if r * bytes_per_row <= max_bytes]
    return max(fitting) if fitting else min(divisors)


def _pool_matrix(size, s):
    """(size//s, size) separable averaging matrix for an s-stride mean pool."""
    rows = jnp.arange(size // s)
    cols = jnp.arange(size)
    return (cols[None, :] // s == rows[:, None]).astype(jnp.float32) / float(s)


def _interp_matrix(out_size, in_size):
    """Bilinear interpolation matrix (align_corners=True), shape (out, in)."""
    if in_size == 1:
        return jnp.ones((out_size, 1), jnp.float32)
    i = jnp.arange(out_size, dtype=jnp.float32)
    if out_size > 1:
        src = i * (in_size - 1) / (out_size - 1)
    else:
        src = jnp.zeros_like(i)
    i0 = jnp.clip(jnp.floor(src), 0, in_size - 1).astype(jnp.int32)
    i1 = jnp.minimum(i0 + 1, in_size - 1)
    w1 = src - i0.astype(jnp.float32)
    w0 = 1.0 - w1
    oh0 = jax.nn.one_hot(i0, in_size, dtype=jnp.float32)
    oh1 = jax.nn.one_hot(i1, in_size, dtype=jnp.float32)
    return w0[:, None] * oh0 + w1[:, None] * oh1


# ----------------------------------------------------------------------------
# Kernel 1: fused normalize + stride-s average pool + 1x1 head conv
#   pooled[ci] = Ph @ x[ci] @ Pw^T            (MXU, per input channel)
#   out[co]    = sum_ci w'[ci,co]*pooled[ci] + b'[co]   (VPU, SMEM scalars)
# where w' / b' have the normalize affine pre-folded in.
# ----------------------------------------------------------------------------
def _norm_pool_head_kernel(w_ref, b_ref, x_ref, ph_ref, pwt_ref, o_ref):
    cin = x_ref.shape[1]
    cout = o_ref.shape[1]
    ph = ph_ref[...]                         # (tile_hp, tile_h)
    pwt = pwt_ref[...]                       # (W, Wp)
    pooled = []
    for ci in range(cin):
        t = jnp.dot(ph, x_ref[0, ci], preferred_element_type=jnp.float32)
        pooled.append(jnp.dot(t, pwt, preferred_element_type=jnp.float32))
    for co in range(cout):
        acc = pooled[0] * w_ref[0, co]
        for ci in range(1, cin):
            acc = acc + pooled[ci] * w_ref[ci, co]
        o_ref[0, co] = acc + b_ref[co]


def norm_pool_head_pallas(x, w_eff, b_eff, s=4, tile_h=None):
    N, Cin, H, W = x.shape
    Cout = w_eff.shape[1]
    assert H % s == 0 and W % s == 0, "stand-in backbone needs H, W % 4 == 0"
    Hp, Wp = H // s, W // s

    if tile_h is None:
        # 32-row unit keeps both the f32 input block (tile_h rows) and the
        # pooled output block (tile_h/4 rows) sublane-legal; ~6 MB of input
        # rows per step amortizes the per-grid-step overhead (mem-bound kernel).
        tile_h = _pick_row_tile(H, Cin * W * 4, 8 * s, 6 << 20)
    assert H % tile_h == 0 and tile_h % s == 0
    n_ht = H // tile_h

    # Pooling is shift-invariant across aligned tiles, so a single local
    # (tile_h/s, tile_h) matrix serves every H-tile (no diagonal-block indexing,
    # no 128-multiple constraint on tile_h).
    ph_local = _pool_matrix(tile_h, s)       # (tile_h//s, tile_h)
    pwt = _pool_matrix(W, s).T               # (W, Wp)

    # TODO(synk): for very large W on v7x, single-buffer pwt (pipeline_mode) or
    # pad Wp to a multiple of 128 for fully lane-dense stores on v5e.
    return pl.pallas_call(
        _norm_pool_head_kernel,
        out_shape=jax.ShapeDtypeStruct((N, Cout, Hp, Wp), jnp.float32),
        grid_spec=pltpu.PrefetchScalarGridSpec(
            num_scalar_prefetch=0,
            grid=(N, n_ht),
            in_specs=[
                pl.BlockSpec(memory_space=pltpu.MemorySpace.SMEM),   # w' (Cin, Cout)
                pl.BlockSpec(memory_space=pltpu.MemorySpace.SMEM),   # b' (Cout,)
                pl.BlockSpec((1, Cin, tile_h, W), lambda n, j: (n, 0, j, 0)),
                pl.BlockSpec((tile_h // s, tile_h), lambda n, j: (0, 0)),
                pl.BlockSpec((W, Wp), lambda n, j: (0, 0)),
            ],
            out_specs=pl.BlockSpec((1, Cout, tile_h // s, Wp),
                                   lambda n, j: (n, 0, j, 0)),
        ),
        compiler_params=pltpu.CompilerParams(
            dimension_semantics=("parallel", "parallel")),
    )(w_eff, b_eff, x, ph_local, pwt)


# ----------------------------------------------------------------------------
# Kernel 2: bilinear upsample (align_corners=True), batched across channels
#   per channel: t[co] = Rh_tile @ feat[co]        (small MXU matmuls -> scratch)
#   batched:     y      = stack(t) @ Rw^T          (one big MXU matmul)
# Operands in bf16, f32 accumulation.
# ----------------------------------------------------------------------------
def _upsample_kernel(feat_ref, rh_ref, rwt_ref, o_ref, t_ref, *, mm_dtype):
    cout = o_ref.shape[1]
    tile_h = o_ref.shape[2]
    rh = rh_ref[...]                         # (tile_h, h)   mm_dtype
    for co in range(cout):
        f = feat_ref[0, co].astype(mm_dtype)
        t_ref[co * tile_h:(co + 1) * tile_h, :] = jnp.dot(
            rh, f, preferred_element_type=jnp.float32)
    y = jnp.dot(t_ref[...].astype(mm_dtype), rwt_ref[...],
                preferred_element_type=jnp.float32)          # (cout*tile_h, W_out)
    for co in range(cout):
        o_ref[0, co] = y[co * tile_h:(co + 1) * tile_h, :]


def upsample_pallas(feat, H_out, W_out, tile_h=None, use_bf16=True):
    N, Cout, h, w = feat.shape
    mm_dtype = jnp.bfloat16 if use_bf16 else jnp.float32

    rh = _interp_matrix(H_out, h).astype(mm_dtype)       # (H_out, h)
    rwt = _interp_matrix(W_out, w).T.astype(mm_dtype)    # (w, W_out)

    if tile_h is None:
        # 128-row unit so the M dimension of both matmuls fills the MXU and the
        # output stores are dense; ~8 MB output-block cap.
        tile_h = _pick_row_tile(H_out, Cout * W_out * 4, 128, 8 << 20)
    assert H_out % tile_h == 0
    n_ht = H_out // tile_h

    return pl.pallas_call(
        functools.partial(_upsample_kernel, mm_dtype=mm_dtype),
        out_shape=jax.ShapeDtypeStruct((N, Cout, H_out, W_out), jnp.float32),
        grid_spec=pltpu.PrefetchScalarGridSpec(
            num_scalar_prefetch=0,
            grid=(N, n_ht),
            in_specs=[
                pl.BlockSpec((1, Cout, h, w), lambda n, j: (n, 0, 0, 0)),
                pl.BlockSpec((tile_h, h), lambda n, j: (j, 0)),
                pl.BlockSpec((w, W_out), lambda n, j: (0, 0)),
            ],
            out_specs=pl.BlockSpec((1, Cout, tile_h, W_out),
                                   lambda n, j: (n, 0, j, 0)),
            scratch_shapes=[pltpu.VMEM((Cout * tile_h, w), jnp.float32)],
        ),
        compiler_params=pltpu.CompilerParams(
            dimension_semantics=("parallel", "parallel")),
    )(feat, rh, rwt)


# ----------------------------------------------------------------------------
# Full Model forward
# ----------------------------------------------------------------------------
MEAN = jnp.array([0.485 * 255, 0.456 * 255, 0.406 * 255], jnp.float32)
INV_STD = 1.0 / jnp.array([0.229 * 255, 0.224 * 255, 0.225 * 255], jnp.float32)

USE_BF16_UPSAMPLE = True   # bf16 MXU operands for kernel 2 (f32 accumulation)


def _model_forward(x, head_w, head_b):
    """x: (N, 3, H, W) float32 NCHW -> (N, Cout, H, W)."""
    N, C, H, W = x.shape
    # TODO(synk): real PANnet backbone/neck/head are config-built (resnet +
    # FPEM_FFM + PAN head) and unavailable; stand-in = stride-4 avg-pool +
    # 1x1 conv projection to 6 channels.
    # Fold normalize into the 1x1 head conv:  (p - m)/s . w + b
    #   = p . (w/s) + (b - m/s . w)
    w_eff = (head_w * INV_STD[:, None]).astype(jnp.float32)                 # (Cin, Cout)
    b_eff = (head_b + jnp.sum(head_w * (-MEAN * INV_STD)[:, None], axis=0)
             ).astype(jnp.float32)                                          # (Cout,)
    feat = norm_pool_head_pallas(x, w_eff, b_eff, s=4)        # (N, Cout, H/4, W/4)
    # F.interpolate(..., size=(H, W), mode='bilinear', align_corners=True)
    y = upsample_pallas(feat, H, W, use_bf16=USE_BF16_UPSAMPLE)
    return y


model_forward = jax.jit(_model_forward)


def model_forward_ref(x, head_w, head_b):
    """Pure-jnp f32 reference of the same math (stand-in backbone = 4x4 avg
    pool expressed with the same separable averaging matrices)."""
    N, C, H, W = x.shape
    s = 4
    xn = (x - MEAN.reshape(1, C, 1, 1)) * INV_STD.reshape(1, C, 1, 1)
    ph = _pool_matrix(H, s)
    pwt = _pool_matrix(W, s).T
    pooled = jnp.einsum("ph,nchw,wq->ncpq", ph, xn, pwt)      # 4x4 mean pool
    feat = jnp.einsum("nchw,co->nohw", pooled, head_w) + head_b.reshape(1, -1, 1, 1)
    rh = _interp_matrix(H, H // s)
    rw = _interp_matrix(W, W // s)
    y = jnp.einsum("Hh,nchw,Ww->ncHW", rh, feat, rw)
    return y


if __name__ == "__main__":
    key = jax.random.PRNGKey(0)
    k_x, k_w, k_b = jax.random.split(key, 3)

    N, C, H, W = 2, 3, 16, 16          # input image, NCHW, 3 channels
    C_OUT = 6                          # stand-in head output channels

    x = jax.random.uniform(k_x, (N, C, H, W), jnp.float32, 0.0, 255.0)
    head_w = jax.random.normal(k_w, (C, C_OUT), jnp.float32) * 0.1
    head_b = jax.random.normal(k_b, (C_OUT,), jnp.float32) * 0.01

    y = jax.block_until_ready(model_forward(x, head_w, head_b))

    y_ref = model_forward_ref(x, head_w, head_b)
    assert y.shape == (N, C_OUT, H, W), y.shape
    max_err = float(jnp.max(jnp.abs(y - y_ref)))
    # bf16 MXU operands in the upsample kernel -> ~1e-2-scale absolute error
    # for O(1) feature values; f32 path would be ~1e-4.
    tol = 5e-2 if USE_BF16_UPSAMPLE else 1e-3
    assert max_err < tol, max_err

    print("KERNEL_OK")
</pallas_src>

<mosaic_0001>
module attributes {stable_mosaic.version = 11 : i64} {
  func.func @_norm_pool_head_kernel(%arg0: i32, %arg1: i32, %arg2: memref<3x6xf32, #tpu.memory_space<smem>>, %arg3: memref<6xf32, #tpu.memory_space<smem>>, %arg4: memref<1x3x16x16xf32, #tpu.memory_space<vmem>>, %arg5: memref<4x16xf32, #tpu.memory_space<vmem>>, %arg6: memref<16x4xf32, #tpu.memory_space<vmem>>, %arg7: memref<1x6x4x4xf32, #tpu.memory_space<vmem>>) attributes {dimension_semantics = [#tpu.dimension_semantics<parallel>, #tpu.dimension_semantics<parallel>], iteration_bounds = array<i64: 2, 1>, scalar_prefetch = 0 : i64, scratch_operands = 0 : i64, tpu.core_type = #tpu.core_type<tc>, window_params = [{transform_indices = @transform_0, window_bounds = array<i64: 3, 6>}, {transform_indices = @transform_1, window_bounds = array<i64: 6>}, {transform_indices = @transform_2, window_bounds = array<i64: 1, 3, 16, 16>}, {pipeline_mode = #tpu.pipeline_mode<synchronous>, transform_indices = @transform_3, window_bounds = array<i64: 4, 16>}, {pipeline_mode = #tpu.pipeline_mode<synchronous>, transform_indices = @transform_4, window_bounds = array<i64: 16, 4>}, {transform_indices = @transform_5, window_bounds = array<i64: 1, 6, 4, 4>}]} {
    %c0 = arith.constant 0 : index
    %c0_0 = arith.constant 0 : index
    %0 = vector.load %arg5[%c0, %c0_0] : memref<4x16xf32, #tpu.memory_space<vmem>>, vector<4x16xf32>
    %c0_1 = arith.constant 0 : index
    %c0_2 = arith.constant 0 : index
    %1 = vector.load %arg6[%c0_1, %c0_2] : memref<16x4xf32, #tpu.memory_space<vmem>>, vector<16x4xf32>
    %c0_3 = arith.constant 0 : index
    %c0_4 = arith.constant 0 : index
    %c0_5 = arith.constant 0 : index
    %c0_6 = arith.constant 0 : index
    %2 = vector.load %arg4[%c0_3, %c0_4, %c0_5, %c0_6] : memref<1x3x16x16xf32, #tpu.memory_space<vmem>>, vector<1x1x16x16xf32>
    %3 = vector.shape_cast %2 : vector<1x1x16x16xf32> to vector<16x16xf32>
    %cst = arith.constant dense<0.000000e+00> : vector<4x16xf32>
    %4 = tpu.matmul %0, %3, %cst {dimension_numbers = #tpu.dot_dimension_numbers<[1], [0], [0], [1], [0, 0, 1, 1], [], []>} : vector<4x16xf32>, vector<16x16xf32>, vector<4x16xf32> -> vector<4x16xf32>
    %cst_7 = arith.constant dense<0.000000e+00> : vector<4x4xf32>
    %5 = tpu.matmul %4, %1, %cst_7 {dimension_numbers = #tpu.dot_dimension_numbers<[1], [0], [0], [1], [0, 0, 1, 1], [], []>} : vector<4x16xf32>, vector<16x4xf32>, vector<4x4xf32> -> vector<4x4xf32>
    %c0_8 = arith.constant 0 : index
    %c1 = arith.constant 1 : index
    %c0_9 = arith.constant 0 : index
    %c0_10 = arith.constant 0 : index
    %6 = vector.load %arg4[%c0_8, %c1, %c0_9, %c0_10] : memref<1x3x16x16xf32, #tpu.memory_space<vmem>>, vector<1x1x16x16xf32>
    %7 = vector.shape_cast %6 : vector<1x1x16x16xf32> to vector<16x16xf32>
    %cst_11 = arith.constant dense<0.000000e+00> : vector<4x16xf32>
    %8 = tpu.matmul %0, %7, %cst_11 {dimension_numbers = #tpu.dot_dimension_numbers<[1], [0], [0], [1], [0, 0, 1, 1], [], []>} : vector<4x16xf32>, vector<16x16xf32>, vector<4x16xf32> -> vector<4x16xf32>
    %cst_12 = arith.constant dense<0.000000e+00> : vector<4x4xf32>
    %9 = tpu.matmul %8, %1, %cst_12 {dimension_numbers = #tpu.dot_dimension_numbers<[1], [0], [0], [1], [0, 0, 1, 1], [], []>} : vector<4x16xf32>, vector<16x4xf32>, vector<4x4xf32> -> vector<4x4xf32>
    %c0_13 = arith.constant 0 : index
    %c2 = arith.constant 2 : index
    %c0_14 = arith.constant 0 : index
    %c0_15 = arith.constant 0 : index
    %10 = vector.load %arg4[%c0_13, %c2, %c0_14, %c0_15] : memref<1x3x16x16xf32, #tpu.memory_space<vmem>>, vector<1x1x16x16xf32>
    %11 = vector.shape_cast %10 : vector<1x1x16x16xf32> to vector<16x16xf32>
    %cst_16 = arith.constant dense<0.000000e+00> : vector<4x16xf32>
    %12 = tpu.matmul %0, %11, %cst_16 {dimension_numbers = #tpu.dot_dimension_numbers<[1], [0], [0], [1], [0, 0, 1, 1], [], []>} : vector<4x16xf32>, vector<16x16xf32>, vector<4x16xf32> -> vector<4x16xf32>
    %cst_17 = arith.constant dense<0.000000e+00> : vector<4x4xf32>
    %13 = tpu.matmul %12, %1, %cst_17 {dimension_numbers = #tpu.dot_dimension_numbers<[1], [0], [0], [1], [0, 0, 1, 1], [], []>} : vector<4x16xf32>, vector<16x4xf32>, vector<4x4xf32> -> vector<4x4xf32>
    %c0_18 = arith.constant 0 : index
    %c0_19 = arith.constant 0 : index
    %14 = memref.load %arg2[%c0_18, %c0_19] : memref<3x6xf32, #tpu.memory_space<smem>>
    %15 = vector.broadcast %14 : f32 to vector<4x4xf32>
    %16 = arith.mulf %5, %15 : vector<4x4xf32>
    %c1_20 = arith.constant 1 : index
    %c0_21 = arith.constant 0 : index
    %17 = memref.load %arg2[%c1_20, %c0_21] : memref<3x6xf32, #tpu.memory_space<smem>>
    %18 = vector.broadcast %17 : f32 to vector<4x4xf32>
    %19 = arith.mulf %9, %18 : vector<4x4xf32>
    %20 = arith.addf %16, %19 : vector<4x4xf32>
    %c2_22 = arith.constant 2 : index
    %c0_23 = arith.constant 0 : index
    %21 = memref.load %arg2[%c2_22, %c0_23] : memref<3x6xf32, #tpu.memory_space<smem>>
    %22 = vector.broadcast %21 : f32 to vector<4x4xf32>
    %23 = arith.mulf %13, %22 : vector<4x4xf32>
    %24 = arith.addf %20, %23 : vector<4x4xf32>
    %c0_24 = arith.constant 0 : index
    %25 = memref.load %arg3[%c0_24] : memref<6xf32, #tpu.memory_space<smem>>
    %26 = vector.broadcast %25 : f32 to vector<4x4xf32>
    %27 = arith.addf %24, %26 : vector<4x4xf32>
    %c0_25 = arith.constant 0 : index
    %c0_26 = arith.constant 0 : index
    %c0_27 = arith.constant 0 : index
    %c0_28 = arith.constant 0 : index
    %28 = vector.load %arg7[%c0_25, %c0_26, %c0_27, %c0_28] : memref<1x6x4x4xf32, #tpu.memory_space<vmem>>, vector<1x1x4x4xf32>
    %29 = vector.shape_cast %28 : vector<1x1x4x4xf32> to vector<4x4xf32>
    %30 = vector.shape_cast %27 : vector<4x4xf32> to vector<1x1x4x4xf32>
    tpu.vector_store %arg7[%c0_25, %c0_26, %c0_27, %c0_28], %30 {strides = array<i32>} : memref<1x6x4x4xf32, #tpu.memory_space<vmem>>, vector<1x1x4x4xf32>,
    %c0_29 = arith.constant 0 : index
    %c1_30 = arith.constant 1 : index
    %31 = memref.load %arg2[%c0_29, %c1_30] : memref<3x6xf32, #tpu.memory_space<smem>>
    %32 = vector.broadcast %31 : f32 to vector<4x4xf32>
    %33 = arith.mulf %5, %32 : vector<4x4xf32>
    %c1_31 = arith.constant 1 : index
    %c1_32 = arith.constant 1 : index
    %34 = memref.load %arg2[%c1_31, %c1_32] : memref<3x6xf32, #tpu.memory_space<smem>>
    %35 = vector.broadcast %34 : f32 to vector<4x4xf32>
    %36 = arith.mulf %9, %35 : vector<4x4xf32>
    %37 = arith.addf %33, %36 : vector<4x4xf32>
    %c2_33 = arith.constant 2 : index
    %c1_34 = arith.constant 1 : index
    %38 = memref.load %arg2[%c2_33, %c1_34] : memref<3x6xf32, #tpu.memory_space<smem>>
    %39 = vector.broadcast %38 : f32 to vector<4x4xf32>
    %40 = arith.mulf %13, %39 : vector<4x4xf32>
    %41 = arith.addf %37, %40 : vector<4x4xf32>
    %c1_35 = arith.constant 1 : index
    %42 = memref.load %arg3[%c1_35] : memref<6xf32, #tpu.memory_space<smem>>
    %43 = vector.broadcast %42 : f32 to vector<4x4xf32>
    %44 = arith.addf %41, %43 : vector<4x4xf32>
    %c0_36 = arith.constant 0 : index
    %c1_37 = arith.constant 1 : index
    %c0_38 = arith.constant 0 : index
    %c0_39 = arith.constant 0 : index
    %45 = vector.load %arg7[%c0_36, %c1_37, %c0_38, %c0_39] : memref<1x6x4x4xf32, #tpu.memory_space<vmem>>, vector<1x1x4x4xf32>
    %46 = vector.shape_cast %45 : vector<1x1x4x4xf32> to vector<4x4xf32>
    %47 = vector.shape_cast %44 : vector<4x4xf32> to vector<1x1x4x4xf32>
    tpu.vector_store %arg7[%c0_36, %c1_37, %c0_38, %c0_39], %47 {strides = array<i32>} : memref<1x6x4x4xf32, #tpu.memory_space<vmem>>, vector<1x1x4x4xf32>,
    %c0_40 = arith.constant 0 : index
    %c2_41 = arith.constant 2 : index
    %48 = memref.load %arg2[%c0_40, %c2_41] : memref<3x6xf32, #tpu.memory_space<smem>>
    %49 = vector.broadcast %48 : f32 to vector<4x4xf32>
    %50 = arith.mulf %5, %49 : vector<4x4xf32>
    %c1_42 = arith.constant 1 : index
    %c2_43 = arith.constant 2 : index
    %51 = memref.load %arg2[%c1_42, %c2_43] : memref<3x6xf32, #tpu.memory_space<smem>>
    %52 = vector.broadcast %51 : f32 to vector<4x4xf32>
    %53 = arith.mulf %9, %52 : vector<4x4xf32>
    %54 = arith.addf %50, %53 : vector<4x4xf32>
    %c2_44 = arith.constant 2 : index
    %c2_45 = arith.constant 2 : index
    %55 = memref.load %arg2[%c2_44, %c2_45] : memref<3x6xf32, #tpu.memory_space<smem>>
    %56 = vector.broadcast %55 : f32 to vector<4x4xf32>
    %57 = arith.mulf %13, %56 : vector<4x4xf32>
    %58 = arith.addf %54, %57 : vector<4x4xf32>
    %c2_46 = arith.constant 2 : index
    %59 = memref.load %arg3[%c2_46] : memref<6xf32, #tpu.memory_space<smem>>
    %60 = vector.broadcast %59 : f32 to vector<4x4xf32>
    %61 = arith.addf %58, %60 : vector<4x4xf32>
    %c0_47 = arith.constant 0 : index
    %c2_48 = arith.constant 2 : index
    %c0_49 = arith.constant 0 : index
    %c0_50 = arith.constant 0 : index
    %62 = vector.load %arg7[%c0_47, %c2_48, %c0_49, %c0_50] : memref<1x6x4x4xf32, #tpu.memory_space<vmem>>, vector<1x1x4x4xf32>
    %63 = vector.shape_cast %62 : vector<1x1x4x4xf32> to vector<4x4xf32>
    %64 = vector.shape_cast %61 : vector<4x4xf32> to vector<1x1x4x4xf32>
    tpu.vector_store %arg7[%c0_47, %c2_48, %c0_49, %c0_50], %64 {strides = array<i32>} : memref<1x6x4x4xf32, #tpu.memory_space<vmem>>, vector<1x1x4x4xf32>,
    %c0_51 = arith.constant 0 : index
    %c3 = arith.constant 3 : index
    %65 = memref.load %arg2[%c0_51, %c3] : memref<3x6xf32, #tpu.memory_space<smem>>
    %66 = vector.broadcast %65 : f32 to vector<4x4xf32>
    %67 = arith.mulf %5, %66 : vector<4x4xf32>
    %c1_52 = arith.constant 1 : index
    %c3_53 = arith.constant 3 : index
    %68 = memref.load %arg2[%c1_52, %c3_53] : memref<3x6xf32, #tpu.memory_space<smem>>
    %69 = vector.broadcast %68 : f32 to vector<4x4xf32>
    %70 = arith.mulf %9, %69 : vector<4x4xf32>
    %71 = arith.addf %67, %70 : vector<4x4xf32>
    %c2_54 = arith.constant 2 : index
    %c3_55 = arith.constant 3 : index
    %72 = memref.load %arg2[%c2_54, %c3_55] : memref<3x6xf32, #tpu.memory_space<smem>>
    %73 = vector.broadcast %72 : f32 to vector<4x4xf32>
    %74 = arith.mulf %13, %73 : vector<4x4xf32>
    %75 = arith.addf %71, %74 : vector<4x4xf32>
    %c3_56 = arith.constant 3 : index
    %76 = memref.load %arg3[%c3_56] : memref<6xf32, #tpu.memory_space<smem>>
    %77 = vector.broadcast %76 : f32 to vector<4x4xf32>
    %78 = arith.addf %75, %77 : vector<4x4xf32>
    %c0_57 = arith.constant 0 : index
    %c3_58 = arith.constant 3 : index
    %c0_59 = arith.constant 0 : index
    %c0_60 = arith.constant 0 : index
    %79 = vector.load %arg7[%c0_57, %c3_58, %c0_59, %c0_60] : memref<1x6x4x4xf32, #tpu.memory_space<vmem>>, vector<1x1x4x4xf32>
    %80 = vector.shape_cast %79 : vector<1x1x4x4xf32> to vector<4x4xf32>
    %81 = vector.shape_cast %78 : vector<4x4xf32> to vector<1x1x4x4xf32>
    tpu.vector_store %arg7[%c0_57, %c3_58, %c0_59, %c0_60], %81 {strides = array<i32>} : memref<1x6x4x4xf32, #tpu.memory_space<vmem>>, vector<1x1x4x4xf32>,
    %c0_61 = arith.constant 0 : index
    %c4 = arith.constant 4 : index
    %82 = memref.load %arg2[%c0_61, %c4] : memref<3x6xf32, #tpu.memory_space<smem>>
    %83 = vector.broadcast %82 : f32 to vector<4x4xf32>
    %84 = arith.mulf %5, %83 : vector<4x4xf32>
    %c1_62 = arith.constant 1 : index
    %c4_63 = arith.constant 4 : index
    %85 = memref.load %arg2[%c1_62, %c4_63] : memref<3x6xf32, #tpu.memory_space<smem>>
    %86 = vector.broadcast %85 : f32 to vector<4x4xf32>
    %87 = arith.mulf %9, %86 : vector<4x4xf32>
    %88 = arith.addf %84, %87 : vector<4x4xf32>
    %c2_64 = arith.constant 2 : index
    %c4_65 = arith.constant 4 : index
    %89 = memref.load %arg2[%c2_64, %c4_65] : memref<3x6xf32, #tpu.memory_space<smem>>
    %90 = vector.broadcast %89 : f32 to vector<4x4xf32>
    %91 = arith.mulf %13, %90 : vector<4x4xf32>
    %92 = arith.addf %88, %91 : vector<4x4xf32>
    %c4_66 = arith.constant 4 : index
    %93 = memref.load %arg3[%c4_66] : memref<6xf32, #tpu.memory_space<smem>>
    %94 = vector.broadcast %93 : f32 to vector<4x4xf32>
    %95 = arith.addf %92, %94 : vector<4x4xf32>
    %c0_67 = arith.constant 0 : index
    %c4_68 = arith.constant 4 : index
    %c0_69 = arith.constant 0 : index
    %c0_70 = arith.constant 0 : index
    %96 = vector.load %arg7[%c0_67, %c4_68, %c0_69, %c0_70] : memref<1x6x4x4xf32, #tpu.memory_space<vmem>>, vector<1x1x4x4xf32>
    %97 = vector.shape_cast %96 : vector<1x1x4x4xf32> to vector<4x4xf32>
    %98 = vector.shape_cast %95 : vector<4x4xf32> to vector<1x1x4x4xf32>
    tpu.vector_store %arg7[%c0_67, %c4_68, %c0_69, %c0_70], %98 {strides = array<i32>} : memref<1x6x4x4xf32, #tpu.memory_space<vmem>>, vector<1x1x4x4xf32>,
    %c0_71 = arith.constant 0 : index
    %c5 = arith.constant 5 : index
    %99 = memref.load %arg2[%c0_71, %c5] : memref<3x6xf32, #tpu.memory_space<smem>>
    %100 = vector.broadcast %99 : f32 to vector<4x4xf32>
    %101 = arith.mulf %5, %100 : vector<4x4xf32>
    %c1_72 = arith.constant 1 : index
    %c5_73 = arith.constant 5 : index
    %102 = memref.load %arg2[%c1_72, %c5_73] : memref<3x6xf32, #tpu.memory_space<smem>>
    %103 = vector.broadcast %102 : f32 to vector<4x4xf32>
    %104 = arith.mulf %9, %103 : vector<4x4xf32>
    %105 = arith.addf %101, %104 : vector<4x4xf32>
    %c2_74 = arith.constant 2 : index
    %c5_75 = arith.constant 5 : index
    %106 = memref.load %arg2[%c2_74, %c5_75] : memref<3x6xf32, #tpu.memory_space<smem>>
    %107 = vector.broadcast %106 : f32 to vector<4x4xf32>
    %108 = arith.mulf %13, %107 : vector<4x4xf32>
    %109 = arith.addf %105, %108 : vector<4x4xf32>
    %c5_76 = arith.constant 5 : index
    %110 = memref.load %arg3[%c5_76] : memref<6xf32, #tpu.memory_space<smem>>
    %111 = vector.broadcast %110 : f32 to vector<4x4xf32>
    %112 = arith.addf %109, %111 : vector<4x4xf32>
    %c0_77 = arith.constant 0 : index
    %c5_78 = arith.constant 5 : index
    %c0_79 = arith.constant 0 : index
    %c0_80 = arith.constant 0 : index
    %113 = vector.load %arg7[%c0_77, %c5_78, %c0_79, %c0_80] : memref<1x6x4x4xf32, #tpu.memory_space<vmem>>, vector<1x1x4x4xf32>
    %114 = vector.shape_cast %113 : vector<1x1x4x4xf32> to vector<4x4xf32>
    %115 = vector.shape_cast %112 : vector<4x4xf32> to vector<1x1x4x4xf32>
    tpu.vector_store %arg7[%c0_77, %c5_78, %c0_79, %c0_80], %115 {strides = array<i32>} : memref<1x6x4x4xf32, #tpu.memory_space<vmem>>, vector<1x1x4x4xf32>,
    return
  }
  func.func @transform_0(%arg0: i32, %arg1: i32) -> (i32, i32) {
    %c0_i32 = arith.constant 0 : i32
    %c0_i32_0 = arith.constant 0 : i32
    %c0_i32_1 = arith.constant 0 : i32
    return %c0_i32, %c0_i32_0 : i32, i32
  }
  func.func @transform_1(%arg0: i32, %arg1: i32) -> i32 {
    %c0_i32 = arith.constant 0 : i32
    %c0_i32_0 = arith.constant 0 : i32
    return %c0_i32 : i32
  }
  func.func @transform_2(%arg0: i32, %arg1: i32) -> (i32, i32, i32, i32) {
    %c0_i32 = arith.constant 0 : i32
    %c0_i32_0 = arith.constant 0 : i32
    %c0_i32_1 = arith.constant 0 : i32
    return %arg0, %c0_i32, %arg1, %c0_i32_0 : i32, i32, i32, i32
  }
  func.func @transform_3(%arg0: i32, %arg1: i32) -> (i32, i32) {
    %c0_i32 = arith.constant 0 : i32
    %c0_i32_0 = arith.constant 0 : i32
    %c0_i32_1 = arith.constant 0 : i32
    return %c0_i32, %c0_i32_0 : i32, i32
  }
  func.func @transform_4(%arg0: i32, %arg1: i32) -> (i32, i32) {
    %c0_i32 = arith.constant 0 : i32
    %c0_i32_0 = arith.constant 0 : i32
    %c0_i32_1 = arith.constant 0 : i32
    return %c0_i32, %c0_i32_0 : i32, i32
  }
  func.func @transform_5(%arg0: i32, %arg1: i32) -> (i32, i32, i32, i32) {
    %c0_i32 = arith.constant 0 : i32
    %c0_i32_0 = arith.constant 0 : i32
    %c0_i32_1 = arith.constant 0 : i32
    return %arg0, %c0_i32, %arg1, %c0_i32_0 : i32, i32, i32, i32
  }
}

module attributes {stable_mosaic.version = 11 : i64} {
  func.func @_upsample_kernel(%arg0: i32, %arg1: i32, %arg2: memref<1x6x4x4xf32, #tpu.memory_space<vmem>>, %arg3: memref<16x4xbf16, #tpu.memory_space<vmem>>, %arg4: memref<4x16xbf16, #tpu.memory_space<vmem>>, %arg5: memref<1x6x16x16xf32, #tpu.memory_space<vmem>>, %arg6: memref<96x4xf32, #tpu.memory_space<vmem>>) attributes {dimension_semantics = [#tpu.dimension_semantics<parallel>, #tpu.dimension_semantics<parallel>], iteration_bounds = array<i64: 2, 1>, scalar_prefetch = 0 : i64, scratch_operands = 1 : i64, tpu.core_type = #tpu.core_type<tc>, window_params = [{transform_indices = @transform_0, window_bounds = array<i64: 1, 6, 4, 4>}, {transform_indices = @transform_1, window_bounds = array<i64: 16, 4>}, {pipeline_mode = #tpu.pipeline_mode<synchronous>, transform_indices = @transform_2, window_bounds = array<i64: 4, 16>}, {transform_indices = @transform_3, window_bounds = array<i64: 1, 6, 16, 16>}]} {
    %c0 = arith.constant 0 : index
    %c0_0 = arith.constant 0 : index
    %0 = vector.load %arg3[%c0, %c0_0] : memref<16x4xbf16, #tpu.memory_space<vmem>>, vector<16x4xbf16>
    %c0_1 = arith.constant 0 : index
    %c0_2 = arith.constant 0 : index
    %c0_3 = arith.constant 0 : index
    %c0_4 = arith.constant 0 : index
    %1 = vector.load %arg2[%c0_1, %c0_2, %c0_3, %c0_4] : memref<1x6x4x4xf32, #tpu.memory_space<vmem>>, vector<1x1x4x4xf32>
    %2 = vector.shape_cast %1 : vector<1x1x4x4xf32> to vector<4x4xf32>
    %3 = arith.truncf %2 : vector<4x4xf32> to vector<4x4xbf16>
    %cst = arith.constant dense<0.000000e+00> : vector<16x4xf32>
    %4 = tpu.matmul %0, %3, %cst {dimension_numbers = #tpu.dot_dimension_numbers<[1], [0], [0], [1], [0, 0, 1, 1], [], []>} : vector<16x4xbf16>, vector<4x4xbf16>, vector<16x4xf32> -> vector<16x4xf32>
    %c0_5 = arith.constant 0 : index
    %c0_6 = arith.constant 0 : index
    %5 = vector.load %arg6[%c0_5, %c0_6] : memref<96x4xf32, #tpu.memory_space<vmem>>, vector<16x4xf32>
    tpu.vector_store %arg6[%c0_5, %c0_6], %4 {strides = array<i32>} : memref<96x4xf32, #tpu.memory_space<vmem>>, vector<16x4xf32>,
    %c0_7 = arith.constant 0 : index
    %c1 = arith.constant 1 : index
    %c0_8 = arith.constant 0 : index
    %c0_9 = arith.constant 0 : index
    %6 = vector.load %arg2[%c0_7, %c1, %c0_8, %c0_9] : memref<1x6x4x4xf32, #tpu.memory_space<vmem>>, vector<1x1x4x4xf32>
    %7 = vector.shape_cast %6 : vector<1x1x4x4xf32> to vector<4x4xf32>
    %8 = arith.truncf %7 : vector<4x4xf32> to vector<4x4xbf16>
    %cst_10 = arith.constant dense<0.000000e+00> : vector<16x4xf32>
    %9 = tpu.matmul %0, %8, %cst_10 {dimension_numbers = #tpu.dot_dimension_numbers<[1], [0], [0], [1], [0, 0, 1, 1], [], []>} : vector<16x4xbf16>, vector<4x4xbf16>, vector<16x4xf32> -> vector<16x4xf32>
    %c16 = arith.constant 16 : index
    %c0_11 = arith.constant 0 : index
    %10 = vector.load %arg6[%c16, %c0_11] : memref<96x4xf32, #tpu.memory_space<vmem>>, vector<16x4xf32>
    tpu.vector_store %arg6[%c16, %c0_11], %9 {strides = array<i32>} : memref<96x4xf32, #tpu.memory_space<vmem>>, vector<16x4xf32>,
    %c0_12 = arith.constant 0 : index
    %c2 = arith.constant 2 : index
    %c0_13 = arith.constant 0 : index
    %c0_14 = arith.constant 0 : index
    %11 = vector.load %arg2[%c0_12, %c2, %c0_13, %c0_14] : memref<1x6x4x4xf32, #tpu.memory_space<vmem>>, vector<1x1x4x4xf32>
    %12 = vector.shape_cast %11 : vector<1x1x4x4xf32> to vector<4x4xf32>
    %13 = arith.truncf %12 : vector<4x4xf32> to vector<4x4xbf16>
    %cst_15 = arith.constant dense<0.000000e+00> : vector<16x4xf32>
    %14 = tpu.matmul %0, %13, %cst_15 {dimension_numbers = #tpu.dot_dimension_numbers<[1], [0], [0], [1], [0, 0, 1, 1], [], []>} : vector<16x4xbf16>, vector<4x4xbf16>, vector<16x4xf32> -> vector<16x4xf32>
    %c32 = arith.constant 32 : index
    %c0_16 = arith.constant 0 : index
    %15 = vector.load %arg6[%c32, %c0_16] : memref<96x4xf32, #tpu.memory_space<vmem>>, vector<16x4xf32>
    tpu.vector_store %arg6[%c32, %c0_16], %14 {strides = array<i32>} : memref<96x4xf32, #tpu.memory_space<vmem>>, vector<16x4xf32>,
    %c0_17 = arith.constant 0 : index
    %c3 = arith.constant 3 : index
    %c0_18 = arith.constant 0 : index
    %c0_19 = arith.constant 0 : index
    %16 = vector.load %arg2[%c0_17, %c3, %c0_18, %c0_19] : memref<1x6x4x4xf32, #tpu.memory_space<vmem>>, vector<1x1x4x4xf32>
    %17 = vector.shape_cast %16 : vector<1x1x4x4xf32> to vector<4x4xf32>
    %18 = arith.truncf %17 : vector<4x4xf32> to vector<4x4xbf16>
    %cst_20 = arith.constant dense<0.000000e+00> : vector<16x4xf32>
    %19 = tpu.matmul %0, %18, %cst_20 {dimension_numbers = #tpu.dot_dimension_numbers<[1], [0], [0], [1], [0, 0, 1, 1], [], []>} : vector<16x4xbf16>, vector<4x4xbf16>, vector<16x4xf32> -> vector<16x4xf32>
    %c48 = arith.constant 48 : index
    %c0_21 = arith.constant 0 : index
    %20 = vector.load %arg6[%c48, %c0_21] : memref<96x4xf32, #tpu.memory_space<vmem>>, vector<16x4xf32>
    tpu.vector_store %arg6[%c48, %c0_21], %19 {strides = array<i32>} : memref<96x4xf32, #tpu.memory_space<vmem>>, vector<16x4xf32>,
    %c0_22 = arith.constant 0 : index
    %c4 = arith.constant 4 : index
    %c0_23 = arith.constant 0 : index
    %c0_24 = arith.constant 0 : index
    %21 = vector.load %arg2[%c0_22, %c4, %c0_23, %c0_24] : memref<1x6x4x4xf32, #tpu.memory_space<vmem>>, vector<1x1x4x4xf32>
    %22 = vector.shape_cast %21 : vector<1x1x4x4xf32> to vector<4x4xf32>
    %23 = arith.truncf %22 : vector<4x4xf32> to vector<4x4xbf16>
    %cst_25 = arith.constant dense<0.000000e+00> : vector<16x4xf32>
    %24 = tpu.matmul %0, %23, %cst_25 {dimension_numbers = #tpu.dot_dimension_numbers<[1], [0], [0], [1], [0, 0, 1, 1], [], []>} : vector<16x4xbf16>, vector<4x4xbf16>, vector<16x4xf32> -> vector<16x4xf32>
    %c64 = arith.constant 64 : index
    %c0_26 = arith.constant 0 : index
    %25 = vector.load %arg6[%c64, %c0_26] : memref<96x4xf32, #tpu.memory_space<vmem>>, vector<16x4xf32>
    tpu.vector_store %arg6[%c64, %c0_26], %24 {strides = array<i32>} : memref<96x4xf32, #tpu.memory_space<vmem>>, vector<16x4xf32>,
    %c0_27 = arith.constant 0 : index
    %c5 = arith.constant 5 : index
    %c0_28 = arith.constant 0 : index
    %c0_29 = arith.constant 0 : index
    %26 = vector.load %arg2[%c0_27, %c5, %c0_28, %c0_29] : memref<1x6x4x4xf32, #tpu.memory_space<vmem>>, vector<1x1x4x4xf32>
    %27 = vector.shape_cast %26 : vector<1x1x4x4xf32> to vector<4x4xf32>
    %28 = arith.truncf %27 : vector<4x4xf32> to vector<4x4xbf16>
    %cst_30 = arith.constant dense<0.000000e+00> : vector<16x4xf32>
    %29 = tpu.matmul %0, %28, %cst_30 {dimension_numbers = #tpu.dot_dimension_numbers<[1], [0], [0], [1], [0, 0, 1, 1], [], []>} : vector<16x4xbf16>, vector<4x4xbf16>, vector<16x4xf32> -> vector<16x4xf32>
    %c80 = arith.constant 80 : index
    %c0_31 = arith.constant 0 : index
    %30 = vector.load %arg6[%c80, %c0_31] : memref<96x4xf32, #tpu.memory_space<vmem>>, vector<16x4xf32>
    tpu.vector_store %arg6[%c80, %c0_31], %29 {strides = array<i32>} : memref<96x4xf32, #tpu.memory_space<vmem>>, vector<16x4xf32>,
    %c0_32 = arith.constant 0 : index
    %c0_33 = arith.constant 0 : index
    %31 = vector.load %arg6[%c0_32, %c0_33] : memref<96x4xf32, #tpu.memory_space<vmem>>, vector<96x4xf32>
    %32 = arith.truncf %31 : vector<96x4xf32> to vector<96x4xbf16>
    %c0_34 = arith.constant 0 : index
    %c0_35 = arith.constant 0 : index
    %33 = vector.load %arg4[%c0_34, %c0_35] : memref<4x16xbf16, #tpu.memory_space<vmem>>, vector<4x16xbf16>
    %cst_36 = arith.constant dense<0.000000e+00> : vector<96x16xf32>
    %34 = tpu.matmul %32, %33, %cst_36 {dimension_numbers = #tpu.dot_dimension_numbers<[1], [0], [0], [1], [0, 0, 1, 1], [], []>} : vector<96x4xbf16>, vector<4x16xbf16>, vector<96x16xf32> -> vector<96x16xf32>
    %35 = vector.extract_strided_slice %34 {offsets = [0, 0], sizes = [16, 16], strides = [1, 1]} : vector<96x16xf32> to vector<16x16xf32>
    %c0_37 = arith.constant 0 : index
    %c0_38 = arith.constant 0 : index
    %c0_39 = arith.constant 0 : index
    %c0_40 = arith.constant 0 : index
    %36 = vector.load %arg5[%c0_37, %c0_38, %c0_39, %c0_40] : memref<1x6x16x16xf32, #tpu.memory_space<vmem>>, vector<1x1x16x16xf32>
    %37 = vector.shape_cast %36 : vector<1x1x16x16xf32> to vector<16x16xf32>
    %38 = vector.shape_cast %35 : vector<16x16xf32> to vector<1x1x16x16xf32>
    tpu.vector_store %arg5[%c0_37, %c0_38, %c0_39, %c0_40], %38 {strides = array<i32>} : memref<1x6x16x16xf32, #tpu.memory_space<vmem>>, vector<1x1x16x16xf32>,
    %39 = vector.extract_strided_slice %34 {offsets = [16, 0], sizes = [16, 16], strides = [1, 1]} : vector<96x16xf32> to vector<16x16xf32>
    %c0_41 = arith.constant 0 : index
    %c1_42 = arith.constant 1 : index
    %c0_43 = arith.constant 0 : index
    %c0_44 = arith.constant 0 : index
    %40 = vector.load %arg5[%c0_41, %c1_42, %c0_43, %c0_44] : memref<1x6x16x16xf32, #tpu.memory_space<vmem>>, vector<1x1x16x16xf32>
    %41 = vector.shape_cast %40 : vector<1x1x16x16xf32> to vector<16x16xf32>
    %42 = vector.shape_cast %39 : vector<16x16xf32> to vector<1x1x16x16xf32>
    tpu.vector_store %arg5[%c0_41, %c1_42, %c0_43, %c0_44], %42 {strides = array<i32>} : memref<1x6x16x16xf32, #tpu.memory_space<vmem>>, vector<1x1x16x16xf32>,
    %43 = vector.extract_strided_slice %34 {offsets = [32, 0], sizes = [16, 16], strides = [1, 1]} : vector<96x16xf32> to vector<16x16xf32>
    %c0_45 = arith.constant 0 : index
    %c2_46 = arith.constant 2 : index
    %c0_47 = arith.constant 0 : index
    %c0_48 = arith.constant 0 : index
    %44 = vector.load %arg5[%c0_45, %c2_46, %c0_47, %c0_48] : memref<1x6x16x16xf32, #tpu.memory_space<vmem>>, vector<1x1x16x16xf32>
    %45 = vector.shape_cast %44 : vector<1x1x16x16xf32> to vector<16x16xf32>
    %46 = vector.shape_cast %43 : vector<16x16xf32> to vector<1x1x16x16xf32>
    tpu.vector_store %arg5[%c0_45, %c2_46, %c0_47, %c0_48], %46 {strides = array<i32>} : memref<1x6x16x16xf32, #tpu.memory_space<vmem>>, vector<1x1x16x16xf32>,
    %47 = vector.extract_strided_slice %34 {offsets = [48, 0], sizes = [16, 16], strides = [1, 1]} : vector<96x16xf32> to vector<16x16xf32>
    %c0_49 = arith.constant 0 : index
    %c3_50 = arith.constant 3 : index
    %c0_51 = arith.constant 0 : index
    %c0_52 = arith.constant 0 : index
    %48 = vector.load %arg5[%c0_49, %c3_50, %c0_51, %c0_52] : memref<1x6x16x16xf32, #tpu.memory_space<vmem>>, vector<1x1x16x16xf32>
    %49 = vector.shape_cast %48 : vector<1x1x16x16xf32> to vector<16x16xf32>
    %50 = vector.shape_cast %47 : vector<16x16xf32> to vector<1x1x16x16xf32>
    tpu.vector_store %arg5[%c0_49, %c3_50, %c0_51, %c0_52], %50 {strides = array<i32>} : memref<1x6x16x16xf32, #tpu.memory_space<vmem>>, vector<1x1x16x16xf32>,
    %51 = vector.extract_strided_slice %34 {offsets = [64, 0], sizes = [16, 16], strides = [1, 1]} : vector<96x16xf32> to vector<16x16xf32>
    %c0_53 = arith.constant 0 : index
    %c4_54 = arith.constant 4 : index
    %c0_55 = arith.constant 0 : index
    %c0_56 = arith.constant 0 : index
    %52 = vector.load %arg5[%c0_53, %c4_54, %c0_55, %c0_56] : memref<1x6x16x16xf32, #tpu.memory_space<vmem>>, vector<1x1x16x16xf32>
    %53 = vector.shape_cast %52 : vector<1x1x16x16xf32> to vector<16x16xf32>
    %54 = vector.shape_cast %51 : vector<16x16xf32> to vector<1x1x16x16xf32>
    tpu.vector_store %arg5[%c0_53, %c4_54, %c0_55, %c0_56], %54 {strides = array<i32>} : memref<1x6x16x16xf32, #tpu.memory_space<vmem>>, vector<1x1x16x16xf32>,
    %55 = vector.extract_strided_slice %34 {offsets = [80, 0], sizes = [16, 16], strides = [1, 1]} : vector<96x16xf32> to vector<16x16xf32>
    %c0_57 = arith.constant 0 : index
    %c5_58 = arith.constant 5 : index
    %c0_59 = arith.constant 0 : index
    %c0_60 = arith.constant 0 : index
    %56 = vector.load %arg5[%c0_57, %c5_58, %c0_59, %c0_60] : memref<1x6x16x16xf32, #tpu.memory_space<vmem>>, vector<1x1x16x16xf32>
    %57 = vector.shape_cast %56 : vector<1x1x16x16xf32> to vector<16x16xf32>
    %58 = vector.shape_cast %55 : vector<16x16xf32> to vector<1x1x16x16xf32>
    tpu.vector_store %arg5[%c0_57, %c5_58, %c0_59, %c0_60], %58 {strides = array<i32>} : memref<1x6x16x16xf32, #tpu.memory_space<vmem>>, vector<1x1x16x16xf32>,
    return
  }
  func.func @transform_0(%arg0: i32, %arg1: i32) -> (i32, i32, i32, i32) {
    %c0_i32 = arith.constant 0 : i32
    %c0_i32_0 = arith.constant 0 : i32
    %c0_i32_1 = arith.constant 0 : i32
    %c0_i32_2 = arith.constant 0 : i32
    return %arg0, %c0_i32, %c0_i32_0, %c0_i32_1 : i32, i32, i32, i32
  }
  func.func @transform_1(%arg0: i32, %arg1: i32) -> (i32, i32) {
    %c0_i32 = arith.constant 0 : i32
    %c0_i32_0 = arith.constant 0 : i32
    return %arg1, %c0_i32 : i32, i32
  }
  func.func @transform_2(%arg0: i32, %arg1: i32) -> (i32, i32) {
    %c0_i32 = arith.constant 0 : i32
    %c0_i32_0 = arith.constant 0 : i32
    %c0_i32_1 = arith.constant 0 : i32
    return %c0_i32, %c0_i32_0 : i32, i32
  }
  func.func @transform_3(%arg0: i32, %arg1: i32) -> (i32, i32, i32, i32) {
    %c0_i32 = arith.constant 0 : i32
    %c0_i32_0 = arith.constant 0 : i32
    %c0_i32_1 = arith.constant 0 : i32
    return %arg0, %c0_i32, %arg1, %c0_i32_0 : i32, i32, i32, i32
  }
}

</mosaic_0001>

<llo_original>
// kernel: _model_forward.3
$region0: #{_model_forward.3}
  #allocation0 [shape = 'u32[]', space=smem, size = 0x4, offset = 0x4, fixed_abs, tag = 'smem constant byte address 0x4 - core index']
  #allocation1 [shape = 'u32[144,128]{1,0:T(1,128)}', space=vmem, size = 0x12000, scoped, tag = 'internal scratch']
  #allocation2 [shape = 'f32[96,4]{1,0:T(8,128)}', space=vmem, size = 0xc000, scoped, tag = 'scratch operand']
  %s0 = inlined_call_operand.vmem [shape: f32[2,6,4,4], index: 0, kind: input, shape index: {}]
  %s1 = inlined_call_operand.vmem [shape: bf16[16,4], index: 1, kind: input, shape index: {}]
  %s2 = inlined_call_operand.vmem [shape: bf16[4,16], index: 2, kind: input, shape index: {}]
  %s3 = inlined_call_operand.hbm [shape: f32[2,6,16,16], index: 3, kind: output, shape index: {}]
  %s4 = sld [smem:[#allocation0]]
  $region45: #{_model_forward.3} parent=0
    _
  %s6 = ssub.s32 1, %s4
  %s7 = scalar_select 0, %s6, %s4
  $region1: #{_model_forward.3} parent=0
    #allocation3 [shape = 'u8[98304]{0}', space=vmem, size = 0x18000, scoped, tag = 'output window, operand 0']
    #allocation4 [shape = 's32[2]{0}', space=sflag, size = 0x8, scoped, tag = 'scoped memory for _model_forward.3']
    %8 = vsyncpa [#allocation4], 0
    %s9 = scalar_lea.sflag [#allocation4], 1
    %10 = vsyncpa %s9, 0
    loop: start=0, step=1, limit=4
    $region2: #{_model_forward.3} parent=1 // loop_pre_header
      _
    $region3: #{_model_forward.3} parent=1 // loop_header
      %s12 = sphi 0, %s16
      %p13 = scmp.ge.s32.totalorder %s12, 4
      %s19 = sphi 0, %s31
      %s20 = sphi 0, %s27
      %s21 = sphi 0, %s19
      %s22 = sphi 0, %s20
      %s23 = sphi 0, %s21
      %s24 = sphi 0, %s22
      %s34 = sphi 0, %s36
      %s37 = sphi 0, %s34
      %s38 = sphi 0, %s37
      %s54 = sphi 0, %s38
      %s60 = sphi 0, %s62
      %s63 = sphi 0, %s60
      %s64 = sphi 0, %s63
      %s80 = sphi 0, %s64
      %s84 = sphi 0, %s84
      %s86 = sphi 0, %s84
      %s87 = sphi 0, %s86
      %s101 = sphi 0, %s87
      %s109 = sphi 0, %s111
      %s112 = sphi 0, %s109
      %s113 = sphi 0, %s112
      %s129 = sphi 0, %s113
    $region4: #{_model_forward.3} parent=1 // loop_header_branch
      %15 = sbr.rel (%p13) target = $region8
    $region5: #{_model_forward.3} parent=1 // loop_body
      %s17 = ssub.s32 %s12, 1
      %s18 = ssub.s32 %s12, 2
      %s25 = sadd.s32 1, %s20
      %p26 = scmp.ge.s32.totalorder %s25, 1
      %s27 = scalar_select %p26, 0, %s25
      %s28 = sadd.s32 1, %s19
      %s29 = scalar_select %p26, %s28, %s19
      %p30 = scmp.ge.s32.totalorder %s29, 2
      %s31 = scalar_select %p30, 0, %s29
      %s32 = ssub.s32 %s19, %s31
      %p33 = scmp.eq.s32.totalorder %s32, 0
      %s35 = sadd.s32 %s34, 1
      %s36 = scalar_select %p33, %s34, %s35
      %p39 = pneg %p33
      %p40 = scmp.eq.s32.totalorder %s12, 1
      %p41 = por %p39, %p40
      %p42 = scmp.ne.s32.totalorder %s34, %s37
      %p43 = scmp.eq.s32.totalorder %s12, 0
      %p44 = por %p42, %p43
      %p45 = scmp.ne.s32.totalorder %s34, %s37
      %p46 = scmp.eq.s32.totalorder %s17, 1
      %p47 = por %p45, %p46
      %p48 = scmp.ne.s32.totalorder %s37, %s38
      %p49 = scmp.eq.s32.totalorder %s17, 0
      %p50 = por %p48, %p49
      %p51 = scmp.ne.s32.totalorder %s37, %s38
      %p52 = scmp.eq.s32.totalorder %s18, 1
      %p53 = por %p51, %p52
      %p55 = scmp.ne.s32.totalorder %s38, %s54
      %p56 = scmp.eq.s32.totalorder %s18, 0
      %p57 = por %p55, %p56
      %s58 = ssub.s32 %s20, %s27
      %p59 = scmp.eq.s32.totalorder %s58, 0
      %s61 = sadd.s32 %s60, 1
      %s62 = scalar_select %p59, %s60, %s61
      %p65 = pneg %p59
      %p66 = scmp.eq.s32.totalorder %s12, 1
      %p67 = por %p65, %p66
      %p68 = scmp.ne.s32.totalorder %s60, %s63
      %p69 = scmp.eq.s32.totalorder %s12, 0
      %p70 = por %p68, %p69
      %p71 = scmp.ne.s32.totalorder %s60, %s63
      %p72 = scmp.eq.s32.totalorder %s17, 1
      %p73 = por %p71, %p72
      %p74 = scmp.ne.s32.totalorder %s63, %s64
      %p75 = scmp.eq.s32.totalorder %s17, 0
      %p76 = por %p74, %p75
      %p77 = scmp.ne.s32.totalorder %s63, %s64
      %p78 = scmp.eq.s32.totalorder %s18, 1
      %p79 = por %p77, %p78
      %p81 = scmp.ne.s32.totalorder %s64, %s80
      %p82 = scmp.eq.s32.totalorder %s18, 0
      %p83 = por %p81, %p82
      %s85 = sadd.s32 %s84, 1
      %p88 = scmp.eq.s32.totalorder %s12, 1
      %p89 = scmp.ne.s32.totalorder %s84, %s86
      %p90 = scmp.eq.s32.totalorder %s12, 0
      %p91 = por %p89, %p90
      %p92 = scmp.ne.s32.totalorder %s84, %s86
      %p93 = scmp.eq.s32.totalorder %s17, 1
      %p94 = por %p92, %p93
      %p95 = scmp.ne.s32.totalorder %s86, %s87
      %p96 = scmp.eq.s32.totalorder %s17, 0
      %p97 = por %p95, %p96
      %p98 = scmp.ne.s32.totalorder %s86, %s87
      %p99 = scmp.eq.s32.totalorder %s18, 1
      %p100 = por %p98, %p99
      %p102 = scmp.ne.s32.totalorder %s87, %s101
      %p103 = scmp.eq.s32.totalorder %s18, 0
      %p104 = por %p102, %p103
      %s105 = ssub.s32 %s19, %s31
      %s106 = ssub.s32 %s20, %s27
      %s107 = sor.u32 %s105, %s106
      %p108 = scmp.eq.s32.totalorder %s107, 0
      %s110 = sadd.s32 %s109, 1
      %s111 = scalar_select %p108, %s109, %s110
      %p114 = pneg %p108
      %p115 = scmp.eq.s32.totalorder %s12, 1
      %p116 = por %p114, %p115
      %p117 = scmp.ne.s32.totalorder %s109, %s112
      %p118 = scmp.eq.s32.totalorder %s12, 0
      %p119 = por %p117, %p118
      %p120 = scmp.ne.s32.totalorder %s109, %s112
      %p121 = scmp.eq.s32.totalorder %s17, 1
      %p122 = por %p120, %p121
      %p123 = scmp.ne.s32.totalorder %s112, %s113
      %p124 = scmp.eq.s32.totalorder %s17, 0
      %p125 = por %p123, %p124
      %p126 = scmp.ne.s32.totalorder %s112, %s113
      %p127 = scmp.eq.s32.totalorder %s18, 1
      %p128 = por %p126, %p127
      %p130 = scmp.ne.s32.totalorder %s113, %s129
      %p131 = scmp.eq.s32.totalorder %s18, 0
      %p132 = por %p130, %p131
      %p133 = scmp.le.s32.totalorder 1, %s12
      %p134 = scmp.lt.s32.totalorder %s12, 3
      %p135 = pnand %p133, %p134
      %p136 = pneg %p135
      // Predicated region
      $region9: #{_model_forward.3} parent=5 // pred_check
        _
      $region10: #{_model_forward.3} parent=5 // pred_check_branch
        %138 = sbr.rel (%p135) target = $region12
      $region11: #{_model_forward.3} parent=5 // pred_region
        %s139 = ssub.s32 %s12, 1
        // Predicated region
        $region13: #{_model_forward.3} parent=11 // pred_check
          %p140 = pneg %p76
        $region14: #{_model_forward.3} parent=11 // pred_check_branch
          %142 = sbr.rel (%p140) target = $region16
        $region15: #{_model_forward.3} parent=11 // pred_region
          %s143 = smul.u32 2, %s22
          %p144 = scmp.lt.s32.totalorder %s143, 1
          %s145 = scalar_select %p144, %s143, 1
          %s146 = smul.addr %s145, 4
          %s147 = scalar_lea.vmem %s1, %s146
          %s148 = smul.u32 2, %s22
        $region16: #{_model_forward.3} parent=11 // pred_fallthru
          _
        // Predicated region
        $region17: #{_model_forward.3} parent=11 // pred_check
          %p149 = pneg %p97
        $region18: #{_model_forward.3} parent=11 // pred_check_branch
          %151 = sbr.rel (%p149) target = $region20
        $region19: #{_model_forward.3} parent=11 // pred_region
          _
        $region20: #{_model_forward.3} parent=11 // pred_fallthru
          _
      $region12: #{_model_forward.3} parent=5 // pred_fallthru
        _
      %p152 = scmp.lt.s32.totalorder %s12, 2
      // Predicated region
      $region21: #{_model_forward.3} parent=5 // pred_check
        %p153 = pneg %p152
      $region22: #{_model_forward.3} parent=5 // pred_check_branch
        %155 = sbr.rel (%p153) target = $region24
      $region23: #{_model_forward.3} parent=5 // pred_region
        // Predicated region
        $region25: #{_model_forward.3} parent=23 // pred_check
          %p156 = pneg %p44
        $region26: #{_model_forward.3} parent=23 // pred_check_branch
          %158 = sbr.rel (%p156) target = $region28
        $region27: #{_model_forward.3} parent=23 // pred_region
          %p159 = scmp.lt.s32.totalorder %s19, 1
          %s160 = scalar_select %p159, %s19, 1
          %s161 = smul.addr %s160, 6
          %s162 = smul.addr %s161, 4
          %s163 = scalar_lea.vmem %s0, %s162
        $region28: #{_model_forward.3} parent=23 // pred_fallthru
          _
      $region24: #{_model_forward.3} parent=5 // pred_fallthru
        _
      %p164 = scmp.le.s32.totalorder 1, %s12
      %p165 = scmp.lt.s32.totalorder %s12, 3
      %p166 = pnand %p164, %p165
      %p167 = pneg %p166
      // Predicated region
      $region29: #{_model_forward.3} parent=5 // pred_check
        _
      $region30: #{_model_forward.3} parent=5 // pred_check_branch
        %169 = sbr.rel (%p166) target = $region32
      $region31: #{_model_forward.3} parent=5 // pred_region
        %s170 = ssub.s32 %s12, 1
        %p171 = scmp.lt.s32.totalorder %s21, 1
        %s172 = scalar_select %p171, %s21, 1
        %s173 = smul.addr %s172, 6
        %s174 = smul.addr %s173, 4
        %s175 = scalar_lea.vmem %s0, %s174
        %p176 = pneg %p50
        %p177 = pneg %p47
        %s178 = smul.u32 2, %s22
        %p179 = scmp.lt.s32.totalorder %s178, 1
        %s180 = scalar_select %p179, %s178, 1
        %s181 = smul.addr %s180, 4
        %s182 = scalar_lea.vmem %s1, %s181
        %p183 = pneg %p76
        %p184 = pneg %p73
        %p185 = pneg %p97
        %p186 = pneg %p94
        %p187 = pneg %p125
        %p188 = pneg %p122
        %s189 = sand.u32 %s112, 1
        %s190 = scalar_lea.sflag [#allocation4], %s189
        %s191 = sand.u32 %s112, 1
        %s192 = smul.addr %s191, 96
        %s193 = scalar_lea.vmem [#allocation3], %s192
        %p194 = scmp.lt.s32.totalorder %s21, 1
        %s195 = scalar_select %p194, %s21, 1
        %s196 = smul.addr %s195, 6
        %s197 = smul.addr %s196, 4
        %s198 = scalar_lea.vmem %s0, %s197
        %s199 = smul.u32 2, %s22
        %p200 = scmp.lt.s32.totalorder %s199, 1
        %s201 = scalar_select %p200, %s199, 1
        %s202 = smul.addr %s201, 4
        %s203 = scalar_lea.vmem %s1, %s202
        %s204 = smul.u32 2, %s22
        %s205 = smul.u32 2, %s22
        %v207 = vld [vmem:[%s203] sm:$0xf]
        %v208 = vld [vmem:[%s203 + $0x4] sm:$0xf]
        %v209 = vld [vmem:[%s198] sm:$0xf]
        %v210 = vpack.c.bf16 %v209, %v209
        %v213 = vunpack.c.l.b16 %v207
        %v214 = vunpack.c.l.b16 %v208
        %v215 = vpack.c.b16 %v214, %v213
        %vm216 = vcmask 31744
        %v218 = vsel %vm216, %v215, 0
        %vm220 = vcmask 1041408
        %v222 = vsel %vm220, %v210, 0
        %224 = vmatprep.subr.bf16.mxu0 0
        %225 = vmatpush1.bf16.msra.mxu0 0
        %226 = vmatprep.subr.bf16.mxu0 0
        %227 = vmatpush1.bf16.msra.mxu0 0
        %228 = vmatprep.subr.bf16.mxu0 0
        %229 = vmatpush1.bf16.msra.mxu0 0
        %230 = vmatprep.subr.bf16.mxu0 0
        %231 = vmatpush1.bf16.msra.mxu0 0
        %232 = vmatprep.subr.bf16.mxu0 0
        %233 = vmatpush1.bf16.msra.mxu0 0
        %234 = vmatprep.subr.bf16.mxu0 0
        %235 = vmatpush1.bf16.msra.mxu0 0
        %236 = vmatprep.subr.bf16.mxu0 0
        %237 = vmatpush1.bf16.msra.mxu0 0
        %238 = vmatprep.subr.bf16.mxu0 0
        %239 = vmatpush1.bf16.msra.mxu0 %v222
        %240 = vmatprep.subr.bf16.mxu0 0
        %241 = vmatpush2.bf16.msra.mxu0 0
        %242 = vmatprep.subr.bf16.mxu0 0
        %243 = vmatpush2.bf16.msra.mxu0 0
        %244 = vmatprep.subr.bf16.mxu0 0
        %245 = vmatpush2.bf16.msra.mxu0 0
        %246 = vmatprep.subr.bf16.mxu0 0
        %247 = vmatpush2.bf16.msra.mxu0 0
        %248 = vmatprep.subr.bf16.mxu0 0
        %249 = vmatpush2.bf16.msra.mxu0 0
        %250 = vmatprep.subr.bf16.mxu0 0
        %251 = vmatpush2.bf16.msra.mxu0 0
        %252 = vmatprep.subr.bf16.mxu0 0
        %253 = vmatpush2.bf16.msra.mxu0 0
        %254 = vmatprep.subr.bf16.mxu0 0
        %255 = vmatpush2.bf16.msra.mxu0 0
        %256 = vmatprep.mubr.bf16.mxu0 0
        %257 = vmatmul.mubr.bf16.gmra.mxu0 %v218
        %v258 = vpop.f32.mrf.mxu0
        %v259 = vadd.f32 0.0, %v258
        %v260 = vpop.f32.mrf.mxu0
        %v261 = vpop.f32.mrf.mxu0
        %v262 = vadd.f32 0.0, %v261
        %v263 = vpop.f32.mrf.mxu0
        %264 = vdwg.mxu0
        %265 = vst.msk [vmem:[#allocation2] sm:$0xff] %vm216, %v259
        %266 = vst.msk [vmem:[#allocation2 + $0x8] sm:$0xff] %vm216, %v262
        %s267 = scalar_lea.vmem %s198, 4
        %v268 = vld [vmem:[%s267] sm:$0xf]
        %v269 = vpack.c.bf16 %v268, %v268
        %v271 = vsel %vm220, %v269, 0
        %273 = vmatprep.subr.bf16.mxu0 0
        %274 = vmatpush1.bf16.msra.mxu0 0
        %275 = vmatprep.subr.bf16.mxu0 0
        %276 = vmatpush1.bf16.msra.mxu0 0
        %277 = vmatprep.subr.bf16.mxu0 0
        %278 = vmatpush1.bf16.msra.mxu0 0
        %279 = vmatprep.subr.bf16.mxu0 0
        %280 = vmatpush1.bf16.msra.mxu0 0
        %281 = vmatprep.subr.bf16.mxu0 0
        %282 = vmatpush1.bf16.msra.mxu0 0
        %283 = vmatprep.subr.bf16.mxu0 0
        %284 = vmatpush1.bf16.msra.mxu0 0
        %285 = vmatprep.subr.bf16.mxu0 0
        %286 = vmatpush1.bf16.msra.mxu0 0
        %287 = vmatprep.subr.bf16.mxu0 0
        %288 = vmatpush1.bf16.msra.mxu0 %v271
        %289 = vmatprep.subr.bf16.mxu0 0
        %290 = vmatpush2.bf16.msra.mxu0 0
        %291 = vmatprep.subr.bf16.mxu0 0
        %292 = vmatpush2.bf16.msra.mxu0 0
        %293 = vmatprep.subr.bf16.mxu0 0
        %294 = vmatpush2.bf16.msra.mxu0 0
        %295 = vmatprep.subr.bf16.mxu0 0
        %296 = vmatpush2.bf16.msra.mxu0 0
        %297 = vmatprep.subr.bf16.mxu0 0
        %298 = vmatpush2.bf16.msra.mxu0 0
        %299 = vmatprep.subr.bf16.mxu0 0
        %300 = vmatpush2.bf16.msra.mxu0 0
        %301 = vmatprep.subr.bf16.mxu0 0
        %302 = vmatpush2.bf16.msra.mxu0 0
        %303 = vmatprep.subr.bf16.mxu0 0
        %304 = vmatpush2.bf16.msra.mxu0 0
        %305 = vmatprep.mubr.bf16.mxu0 0
        %306 = vmatmul.mubr.bf16.gmra.mxu0 %v218
        %v307 = vpop.f32.mrf.mxu0
        %v308 = vadd.f32 0.0, %v307
        %v309 = vpop.f32.mrf.mxu0
        %v310 = vpop.f32.mrf.mxu0
        %v311 = vadd.f32 0.0, %v310
        %v312 = vpop.f32.mrf.mxu0
        %313 = vdwg.mxu0
        %314 = vst.msk [vmem:[#allocation2 + $0x10] sm:$0xff] %vm216, %v308
        %315 = vst.msk [vmem:[#allocation2 + $0x18] sm:$0xff] %vm216, %v311
        %s316 = scalar_lea.vmem %s198, 8
        %v317 = vld [vmem:[%s316] sm:$0xf]
        %v318 = vpack.c.bf16 %v317, %v317
        %v320 = vsel %vm220, %v318, 0
        %322 = vmatprep.subr.bf16.mxu0 0
        %323 = vmatpush1.bf16.msra.mxu0 0
        %324 = vmatprep.subr.bf16.mxu0 0
        %325 = vmatpush1.bf16.msra.mxu0 0
        %326 = vmatprep.subr.bf16.mxu0 0
        %327 = vmatpush1.bf16.msra.mxu0 0
        %328 = vmatprep.subr.bf16.mxu0 0
        %329 = vmatpush1.bf16.msra.mxu0 0
        %330 = vmatprep.subr.bf16.mxu0 0
        %331 = vmatpush1.bf16.msra.mxu0 0
        %332 = vmatprep.subr.bf16.mxu0 0
        %333 = vmatpush1.bf16.msra.mxu0 0
        %334 = vmatprep.subr.bf16.mxu0 0
        %335 = vmatpush1.bf16.msra.mxu0 0
        %336 = vmatprep.subr.bf16.mxu0 0
        %337 = vmatpush1.bf16.msra.mxu0 %v320
        %338 = vmatprep.subr.bf16.mxu0 0
        %339 = vmatpush2.bf16.msra.mxu0 0
        %340 = vmatprep.subr.bf16.mxu0 0
        %341 = vmatpush2.bf16.msra.mxu0 0
        %342 = vmatprep.subr.bf16.mxu0 0
        %343 = vmatpush2.bf16.msra.mxu0 0
        %344 = vmatprep.subr.bf16.mxu0 0
        %345 = vmatpush2.bf16.msra.mxu0 0
        %346 = vmatprep.subr.bf16.mxu0 0
        %347 = vmatpush2.bf16.msra.mxu0 0
        %348 = vmatprep.subr.bf16.mxu0 0
        %349 = vmatpush2.bf16.msra.mxu0 0
        %350 = vmatprep.subr.bf16.mxu0 0
        %351 = vmatpush2.bf16.msra.mxu0 0
        %352 = vmatprep.subr.bf16.mxu0 0
        %353 = vmatpush2.bf16.msra.mxu0 0
        %354 = vmatprep.mubr.bf16.mxu0 0
        %355 = vmatmul.mubr.bf16.gmra.mxu0 %v218
        %v356 = vpop.f32.mrf.mxu0
        %v357 = vadd.f32 0.0, %v356
        %v358 = vpop.f32.mrf.mxu0
        %v359 = vpop.f32.mrf.mxu0
        %v360 = vadd.f32 0.0, %v359
        %v361 = vpop.f32.mrf.mxu0
        %362 = vdwg.mxu0
        %363 = vst.msk [vmem:[#allocation2 + $0x20] sm:$0xff] %vm216, %v357
        %364 = vst.msk [vmem:[#allocation2 + $0x28] sm:$0xff] %vm216, %v360
        %s365 = scalar_lea.vmem %s198, 12
        %v366 = vld [vmem:[%s365] sm:$0xf]
        %v367 = vpack.c.bf16 %v366, %v366
        %v369 = vsel %vm220, %v367, 0
        %371 = vmatprep.subr.bf16.mxu0 0
        %372 = vmatpush1.bf16.msra.mxu0 0
        %373 = vmatprep.subr.bf16.mxu0 0
        %374 = vmatpush1.bf16.msra.mxu0 0
        %375 = vmatprep.subr.bf16.mxu0 0
        %376 = vmatpush1.bf16.msra.mxu0 0
        %377 = vmatprep.subr.bf16.mxu0 0
        %378 = vmatpush1.bf16.msra.mxu0 0
        %379 = vmatprep.subr.bf16.mxu0 0
        %380 = vmatpush1.bf16.msra.mxu0 0
        %381 = vmatprep.subr.bf16.mxu0 0
        %382 = vmatpush1.bf16.msra.mxu0 0
        %383 = vmatprep.subr.bf16.mxu0 0
        %384 = vmatpush1.bf16.msra.mxu0 0
        %385 = vmatprep.subr.bf16.mxu0 0
        %386 = vmatpush1.bf16.msra.mxu0 %v369
        %387 = vmatprep.subr.bf16.mxu0 0
        %388 = vmatpush2.bf16.msra.mxu0 0
        %389 = vmatprep.subr.bf16.mxu0 0
        %390 = vmatpush2.bf16.msra.mxu0 0
        %391 = vmatprep.subr.bf16.mxu0 0
        %392 = vmatpush2.bf16.msra.mxu0 0
        %393 = vmatprep.subr.bf16.mxu0 0
        %394 = vmatpush2.bf16.msra.mxu0 0
        %395 = vmatprep.subr.bf16.mxu0 0
        %396 = vmatpush2.bf16.msra.mxu0 0
        %397 = vmatprep.subr.bf16.mxu0 0
        %398 = vmatpush2.bf16.msra.mxu0 0
        %399 = vmatprep.subr.bf16.mxu0 0
        %400 = vmatpush2.bf16.msra.mxu0 0
        %401 = vmatprep.subr.bf16.mxu0 0
        %402 = vmatpush2.bf16.msra.mxu0 0
        %403 = vmatprep.mubr.bf16.mxu0 0
        %404 = vmatmul.mubr.bf16.gmra.mxu0 %v218
        %v405 = vpop.f32.mrf.mxu0
        %v406 = vadd.f32 0.0, %v405
        %v407 = vpop.f32.mrf.mxu0
        %v408 = vpop.f32.mrf.mxu0
        %v409 = vadd.f32 0.0, %v408
        %v410 = vpop.f32.mrf.mxu0
        %411 = vdwg.mxu0
        %412 = vst.msk [vmem:[#allocation2 + $0x30] sm:$0xff] %vm216, %v406
        %413 = vst.msk [vmem:[#allocation2 + $0x38] sm:$0xff] %vm216, %v409
        %s414 = scalar_lea.vmem %s198, 16
        %v415 = vld [vmem:[%s414] sm:$0xf]
        %v416 = vpack.c.bf16 %v415, %v415
        %v418 = vsel %vm220, %v416, 0
        %420 = vmatprep.subr.bf16.mxu0 0
        %421 = vmatpush1.bf16.msra.mxu0 0
        %422 = vmatprep.subr.bf16.mxu0 0
        %423 = vmatpush1.bf16.msra.mxu0 0
        %424 = vmatprep.subr.bf16.mxu0 0
        %425 = vmatpush1.bf16.msra.mxu0 0
        %426 = vmatprep.subr.bf16.mxu0 0
        %427 = vmatpush1.bf16.msra.mxu0 0
        %428 = vmatprep.subr.bf16.mxu0 0
        %429 = vmatpush1.bf16.msra.mxu0 0
        %430 = vmatprep.subr.bf16.mxu0 0
        %431 = vmatpush1.bf16.msra.mxu0 0
        %432 = vmatprep.subr.bf16.mxu0 0
        %433 = vmatpush1.bf16.msra.mxu0 0
        %434 = vmatprep.subr.bf16.mxu0 0
        %435 = vmatpush1.bf16.msra.mxu0 %v418
        %436 = vmatprep.subr.bf16.mxu0 0
        %437 = vmatpush2.bf16.msra.mxu0 0
        %438 = vmatprep.subr.bf16.mxu0 0
        %439 = vmatpush2.bf16.msra.mxu0 0
        %440 = vmatprep.subr.bf16.mxu0 0
        %441 = vmatpush2.bf16.msra.mxu0 0
        %442 = vmatprep.subr.bf16.mxu0 0
        %443 = vmatpush2.bf16.msra.mxu0 0
        %444 = vmatprep.subr.bf16.mxu0 0
        %445 = vmatpush2.bf16.msra.mxu0 0
        %446 = vmatprep.subr.bf16.mxu0 0
        %447 = vmatpush2.bf16.msra.mxu0 0
        %448 = vmatprep.subr.bf16.mxu0 0
        %449 = vmatpush2.bf16.msra.mxu0 0
        %450 = vmatprep.subr.bf16.mxu0 0
        %451 = vmatpush2.bf16.msra.mxu0 0
        %452 = vmatprep.mubr.bf16.mxu0 0
        %453 = vmatmul.mubr.bf16.gmra.mxu0 %v218
        %v454 = vpop.f32.mrf.mxu0
        %v455 = vadd.f32 0.0, %v454
        %v456 = vpop.f32.mrf.mxu0
        %v457 = vpop.f32.mrf.mxu0
        %v458 = vadd.f32 0.0, %v457
        %v459 = vpop.f32.mrf.mxu0
        %460 = vdwg.mxu0
        %461 = vst.msk [vmem:[#allocation2 + $0x40] sm:$0xff] %vm216, %v455
        %462 = vst.msk [vmem:[#allocation2 + $0x48] sm:$0xff] %vm216, %v458
        %s463 = scalar_lea.vmem %s198, 20
        %v464 = vld [vmem:[%s463] sm:$0xf]
        %v465 = vpack.c.bf16 %v464, %v464
        %v467 = vsel %vm220, %v465, 0
        %469 = vmatprep.subr.bf16.mxu0 0
        %470 = vmatpush1.bf16.msra.mxu0 0
        %471 = vmatprep.subr.bf16.mxu0 0
        %472 = vmatpush1.bf16.msra.mxu0 0
        %473 = vmatprep.subr.bf16.mxu0 0
        %474 = vmatpush1.bf16.msra.mxu0 0
        %475 = vmatprep.subr.bf16.mxu0 0
        %476 = vmatpush1.bf16.msra.mxu0 0
        %477 = vmatprep.subr.bf16.mxu0 0
        %478 = vmatpush1.bf16.msra.mxu0 0
        %479 = vmatprep.subr.bf16.mxu0 0
        %480 = vmatpush1.bf16.msra.mxu0 0
        %481 = vmatprep.subr.bf16.mxu0 0
        %482 = vmatpush1.bf16.msra.mxu0 0
        %483 = vmatprep.subr.bf16.mxu0 0
        %484 = vmatpush1.bf16.msra.mxu0 %v467
        %485 = vmatprep.subr.bf16.mxu0 0
        %486 = vmatpush2.bf16.msra.mxu0 0
        %487 = vmatprep.subr.bf16.mxu0 0
        %488 = vmatpush2.bf16.msra.mxu0 0
        %489 = vmatprep.subr.bf16.mxu0 0
        %490 = vmatpush2.bf16.msra.mxu0 0
        %491 = vmatprep.subr.bf16.mxu0 0
        %492 = vmatpush2.bf16.msra.mxu0 0
        %493 = vmatprep.subr.bf16.mxu0 0
        %494 = vmatpush2.bf16.msra.mxu0 0
        %495 = vmatprep.subr.bf16.mxu0 0
        %496 = vmatpush2.bf16.msra.mxu0 0
        %497 = vmatprep.subr.bf16.mxu0 0
        %498 = vmatpush2.bf16.msra.mxu0 0
        %499 = vmatprep.subr.bf16.mxu0 0
        %500 = vmatpush2.bf16.msra.mxu0 0
        %501 = vmatprep.mubr.bf16.mxu0 0
        %502 = vmatmul.mubr.bf16.gmra.mxu0 %v218
        %v503 = vpop.f32.mrf.mxu0
        %v504 = vadd.f32 0.0, %v503
        %v505 = vpop.f32.mrf.mxu0
        %v506 = vpop.f32.mrf.mxu0
        %v507 = vadd.f32 0.0, %v506
        %v508 = vpop.f32.mrf.mxu0
        %509 = vdwg.mxu0
        %510 = vst.msk [vmem:[#allocation2 + $0x50] sm:$0xff] %vm216, %v504
        %511 = vst.msk [vmem:[#allocation2 + $0x58] sm:$0xff] %vm216, %v507
        %v512 = vld [vmem:[#allocation2] sm:$0xff]
        %v513 = vld [vmem:[#allocation2 + $0x8] sm:$0xff]
        %v514 = vld [vmem:[#allocation2 + $0x10] sm:$0xff]
        %v515 = vld [vmem:[#allocation2 + $0x18] sm:$0xff]
        %v516 = vld [vmem:[#allocation2 + $0x20] sm:$0xff]
        %v517 = vld [vmem:[#allocation2 + $0x28] sm:$0xff]
        %v518 = vld [vmem:[#allocation2 + $0x30] sm:$0xff]
        %v519 = vld [vmem:[#allocation2 + $0x38] sm:$0xff]
        %v520 = vld [vmem:[#allocation2 + $0x40] sm:$0xff]
        %v521 = vld [vmem:[#allocation2 + $0x48] sm:$0xff]
        %v522 = vld [vmem:[#allocation2 + $0x50] sm:$0xff]
        %v523 = vld [vmem:[#allocation2 + $0x58] sm:$0xff]
        %v524 = vpack.c.bf16 %v513, %v512
        %v525 = vpack.c.bf16 %v515, %v514
        %v526 = vpack.c.bf16 %v517, %v516
        %v527 = vpack.c.bf16 %v519, %v518
        %v528 = vpack.c.bf16 %v521, %v520
        %v529 = vpack.c.bf16 %v523, %v522
        %v530 = vld [vmem:[%s2] sm:$0x3]
        %v532 = vsel %vm216, %v524, 0
        %v535 = vsel %vm216, %v525, 0
        %v538 = vsel %vm216, %v526, 0
        %v541 = vsel %vm216, %v527, 0
        %v544 = vsel %vm216, %v528, 0
        %v547 = vsel %vm216, %v529, 0
        %v550 = vsel %vm220, %v530, 0
        %552 = vmatprep.subr.bf16.mxu0 0
        %553 = vmatpush1.bf16.msra.mxu0 0
        %554 = vmatprep.subr.bf16.mxu0 0
        %555 = vmatpush1.bf16.msra.mxu0 0
        %556 = vmatprep.subr.bf16.mxu0 0
        %557 = vmatpush1.bf16.msra.mxu0 0
        %558 = vmatprep.subr.bf16.mxu0 0
        %559 = vmatpush1.bf16.msra.mxu0 0
        %560 = vmatprep.subr.bf16.mxu0 0
        %561 = vmatpush1.bf16.msra.mxu0 0
        %562 = vmatprep.subr.bf16.mxu0 0
        %563 = vmatpush1.bf16.msra.mxu0 0
        %564 = vmatprep.subr.bf16.mxu0 0
        %565 = vmatpush1.bf16.msra.mxu0 0
        %566 = vmatprep.subr.bf16.mxu0 0
        %567 = vmatpush1.bf16.msra.mxu0 %v550
        %568 = vmatprep.subr.bf16.mxu0 0
        %569 = vmatpush2.bf16.msra.mxu0 0
        %570 = vmatprep.subr.bf16.mxu0 0
        %571 = vmatpush2.bf16.msra.mxu0 0
        %572 = vmatprep.subr.bf16.mxu0 0
        %573 = vmatpush2.bf16.msra.mxu0 0
        %574 = vmatprep.subr.bf16.mxu0 0
        %575 = vmatpush2.bf16.msra.mxu0 0
        %576 = vmatprep.subr.bf16.mxu0 0
        %577 = vmatpush2.bf16.msra.mxu0 0
        %578 = vmatprep.subr.bf16.mxu0 0
        %579 = vmatpush2.bf16.msra.mxu0 0
        %580 = vmatprep.subr.bf16.mxu0 0
        %581 = vmatpush2.bf16.msra.mxu0 0
        %582 = vmatprep.subr.bf16.mxu0 0
        %583 = vmatpush2.bf16.msra.mxu0 0
        %584 = vmatprep.mubr.bf16.mxu0 0
        %585 = vmatmul.mubr.bf16.gmra.mxu0 %v532
        %v586 = vpop.f32.mrf.mxu0
        %v587 = vadd.f32 0.0, %v586
        %v588 = vpop.f32.mrf.mxu0
        %v589 = vpop.f32.mrf.mxu0
        %v590 = vadd.f32 0.0, %v589
        %v591 = vpop.f32.mrf.mxu0
        %592 = vmatprep.mubr.bf16.mxu0 0
        %593 = vmatmul.mubr.bf16.gmra.mxu0 %v535
        %v594 = vpop.f32.mrf.mxu0
        %v595 = vadd.f32 0.0, %v594
        %v596 = vpop.f32.mrf.mxu0
        %v597 = vpop.f32.mrf.mxu0
        %v598 = vadd.f32 0.0, %v597
        %v599 = vpop.f32.mrf.mxu0
        %600 = vmatprep.mubr.bf16.mxu0 0
        %601 = vmatmul.mubr.bf16.gmra.mxu0 %v538
        %v602 = vpop.f32.mrf.mxu0
        %v603 = vadd.f32 0.0, %v602
        %v604 = vpop.f32.mrf.mxu0
        %v605 = vpop.f32.mrf.mxu0
        %v606 = vadd.f32 0.0, %v605
        %v607 = vpop.f32.mrf.mxu0
        %608 = vmatprep.mubr.bf16.mxu0 0
        %609 = vmatmul.mubr.bf16.gmra.mxu0 %v541
        %v610 = vpop.f32.mrf.mxu0
        %v611 = vadd.f32 0.0, %v610
        %v612 = vpop.f32.mrf.mxu0
        %v613 = vpop.f32.mrf.mxu0
        %v614 = vadd.f32 0.0, %v613
        %v615 = vpop.f32.mrf.mxu0
        %616 = vmatprep.mubr.bf16.mxu0 0
        %617 = vmatmul.mubr.bf16.gmra.mxu0 %v544
        %v618 = vpop.f32.mrf.mxu0
        %v619 = vadd.f32 0.0, %v618
        %v620 = vpop.f32.mrf.mxu0
        %v621 = vpop.f32.mrf.mxu0
        %v622 = vadd.f32 0.0, %v621
        %v623 = vpop.f32.mrf.mxu0
        %624 = vmatprep.mubr.bf16.mxu0 0
        %625 = vmatmul.mubr.bf16.gmra.mxu0 %v547
        %v626 = vpop.f32.mrf.mxu0
        %v627 = vadd.f32 0.0, %v626
        %v628 = vpop.f32.mrf.mxu0
        %v629 = vpop.f32.mrf.mxu0
        %v630 = vadd.f32 0.0, %v629
        %v631 = vpop.f32.mrf.mxu0
        %632 = vdwg.mxu0
        %vm633 = vcmask 130048
        %634 = vst.msk [vmem:[%s193] sm:$0xff] %vm633, %v587
        %635 = vst.msk [vmem:[%s193 + $0x8] sm:$0xff] %vm633, %v590
        %s636 = scalar_lea.vmem %s193, 16 [#allocation3]
        %637 = vst.msk [vmem:[%s636] sm:$0xff] %vm633, %v595
        %638 = vst.msk [vmem:[%s636 + $0x8] sm:$0xff] %vm633, %v598
        %s639 = scalar_lea.vmem %s193, 32 [#allocation3]
        %640 = vst.msk [vmem:[%s639] sm:$0xff] %vm633, %v603
        %641 = vst.msk [vmem:[%s639 + $0x8] sm:$0xff] %vm633, %v606
        %s642 = scalar_lea.vmem %s193, 48 [#allocation3]
        %643 = vst.msk [vmem:[%s642] sm:$0xff] %vm633, %v611
        %644 = vst.msk [vmem:[%s642 + $0x8] sm:$0xff] %vm633, %v614
        %s645 = scalar_lea.vmem %s193, 64 [#allocation3]
        %646 = vst.msk [vmem:[%s645] sm:$0xff] %vm633, %v619
        %647 = vst.msk [vmem:[%s645 + $0x8] sm:$0xff] %vm633, %v622
        %s648 = scalar_lea.vmem %s193, 80 [#allocation3]
        %649 = vst.msk [vmem:[%s648] sm:$0xff] %vm633, %v627
        %650 = vst.msk [vmem:[%s648 + $0x8] sm:$0xff] %vm633, %v630
        %s651 = sand.u32 %s112, 1
        %s652 = scalar_lea.sflag [#allocation4], %s651
        %s653 = sand.u32 %s112, 1
        %s654 = smul.addr %s653, 96
        %s655 = scalar_lea.vmem [#allocation3], %s654
        // Predicated region
        $region33: #{_model_forward.3} parent=31 // pred_check
          %p656 = pneg %p122
        $region34: #{_model_forward.3} parent=31 // pred_check_branch
          %658 = sbr.rel (%p656) target = $region36
        $region35: #{_model_forward.3} parent=31 // pred_region
          %s659 = smul.u32 2, %s22
          %s661 = ssub.s32 1536, 1536
          %662 = vsyncadd %s652, %s661
          %s663 = smul.addr %s21, 12
          %s664 = sadd.s32 %s659, %s663
          %s665 = smul.addr %s664, 128
          %s666 = scalar_lea.hbm %s3, %s665
          %s667 = sshll.u32 %s655, 4
          %s668 = int_to_ptr.vmem [resolvable:$true] %s667
          %673 = dma.vmem_to_hbm [thread:$0]  %s668, 1536, %s666, %s652, 128, 128, 8
        $region36: #{_model_forward.3} parent=31 // pred_fallthru
          _
      $region32: #{_model_forward.3} parent=5 // pred_fallthru
        _
      %p674 = scmp.le.s32.totalorder 2, %s12
      // Predicated region
      $region37: #{_model_forward.3} parent=5 // pred_check
        %p675 = pneg %p674
      $region38: #{_model_forward.3} parent=5 // pred_check_branch
        %677 = sbr.rel (%p675) target = $region40
      $region39: #{_model_forward.3} parent=5 // pred_region
        %s678 = ssub.s32 %s12, 2
        // Predicated region
        $region41: #{_model_forward.3} parent=39 // pred_check
          %p679 = pneg %p128
        $region42: #{_model_forward.3} parent=39 // pred_check_branch
          %681 = sbr.rel (%p679) target = $region44
        $region43: #{_model_forward.3} parent=39 // pred_region
          %s682 = sand.u32 %s113, 1
          %s683 = scalar_lea.sflag [#allocation4], %s682
          %s684 = sand.u32 %s113, 1
          %s685 = smul.addr %s684, 96
          %s686 = scalar_lea.vmem [#allocation3], %s685
          %687 = dma.done %s683, 1536
        $region44: #{_model_forward.3} parent=39 // pred_fallthru
          _
      $region40: #{_model_forward.3} parent=5 // pred_fallthru
        _
    $region6: #{_model_forward.3} parent=1 // loop_footer
      %s16 = sadd.s32 1, %s12
    $region7: #{_model_forward.3} parent=1 // loop_footer_branch
      %11 = sbr.rel target = $region3
    $region8: #{_model_forward.3} parent=1 // loop_exit
      _
    %688 = vsyncpa [#allocation4], 1
    %s689 = scalar_lea.sflag [#allocation4], 1
    %690 = vsyncpa %s689, 1

// kernel: _model_forward.2
$region0: #{_model_forward.2}
  #allocation0 [shape = 'u32[]', space=smem, size = 0x4, offset = 0x4, fixed_abs, tag = 'smem constant byte address 0x4 - core index']
  #allocation1 [shape = 'u32[144,128]{1,0:T(1,128)}', space=vmem, size = 0x12000, scoped, tag = 'internal scratch']
  %s0 = inlined_call_operand.vmem [shape: f32[3,6], index: 0, kind: input, shape index: {}]
  %s1 = inlined_call_operand.vmem [shape: f32[6], index: 1, kind: input, shape index: {}]
  %s2 = inlined_call_operand.hbm [shape: f32[2,3,16,16], index: 2, kind: input, shape index: {}]
  %s3 = inlined_call_operand.vmem [shape: f32[4,16], index: 3, kind: input, shape index: {}]
  %s4 = inlined_call_operand.vmem [shape: f32[16,4], index: 4, kind: input, shape index: {}]
  %s5 = inlined_call_operand.vmem [shape: f32[2,6,4,4], index: 5, kind: output, shape index: {}]
  %s6 = sld [smem:[#allocation0]]
  $region65: #{_model_forward.2} parent=0
    _
  %s8 = ssub.s32 1, %s6
  %s9 = scalar_select 0, %s8, %s6
  $region1: #{_model_forward.2} parent=0
    #allocation2 [shape = 'u8[2048]{0}', space=smem, size = 0x800, scoped, tag = 'input window, operand 0, single buffered']
    #allocation3 [shape = 's32[2]{0}', space=sflag, size = 0x8, scoped, tag = 'scoped memory for _model_forward.2']
    #allocation4 [shape = 's32[2]{0}', space=sflag, size = 0x8, scoped, tag = 'scoped memory for _model_forward.2']
    #allocation5 [shape = 'u8[512]{0}', space=smem, size = 0x200, scoped, tag = 'input window, operand 1, single buffered']
    #allocation6 [shape = 's32[1]{0}', space=sflag, size = 0x4, scoped, tag = 'scoped memory for _model_forward.2']
    #allocation7 [shape = 'u8[49152]{0}', space=vmem, size = 0xc000, scoped, tag = 'input window, operand 2']
    %10 = vsyncpa [#allocation4], 0
    %11 = vsyncpa [#allocation6], 0
    %12 = vsyncpa [#allocation3], 0
    %s13 = scalar_lea.sflag [#allocation3], 1
    %14 = vsyncpa %s13, 0
    loop: start=0, step=1, limit=4
    $region2: #{_model_forward.2} parent=1 // loop_pre_header
      _
    $region3: #{_model_forward.2} parent=1 // loop_header
      %s16 = sphi 0, %s20
      %p17 = scmp.ge.s32.totalorder %s16, 4
      %s23 = sphi 0, %s35
      %s24 = sphi 0, %s31
      %s25 = sphi 0, %s23
      %s26 = sphi 0, %s24
      %s27 = sphi 0, %s25
      %s28 = sphi 0, %s26
      %s36 = sphi 0, %s36
      %s38 = sphi 0, %s36
      %s39 = sphi 0, %s38
      %s53 = sphi 0, %s39
      %s57 = sphi 0, %s57
      %s59 = sphi 0, %s57
      %s60 = sphi 0, %s59
      %s74 = sphi 0, %s60
      %s82 = sphi 0, %s84
      %s85 = sphi 0, %s82
      %s86 = sphi 0, %s85
      %s102 = sphi 0, %s86
      %s106 = sphi 0, %s106
      %s108 = sphi 0, %s106
      %s109 = sphi 0, %s108
      %s123 = sphi 0, %s109
      %s127 = sphi 0, %s127
      %s129 = sphi 0, %s127
      %s130 = sphi 0, %s129
      %s144 = sphi 0, %s130
      %s152 = sphi 0, %s154
      %s155 = sphi 0, %s152
      %s156 = sphi 0, %s155
      %s172 = sphi 0, %s156
    $region4: #{_model_forward.2} parent=1 // loop_header_branch
      %19 = sbr.rel (%p17) target = $region8
    $region5: #{_model_forward.2} parent=1 // loop_body
      %s21 = ssub.s32 %s16, 1
      %s22 = ssub.s32 %s16, 2
      %s29 = sadd.s32 1, %s24
      %p30 = scmp.ge.s32.totalorder %s29, 1
      %s31 = scalar_select %p30, 0, %s29
      %s32 = sadd.s32 1, %s23
      %s33 = scalar_select %p30, %s32, %s23
      %p34 = scmp.ge.s32.totalorder %s33, 2
      %s35 = scalar_select %p34, 0, %s33
      %s37 = sadd.s32 %s36, 1
      %p40 = scmp.eq.s32.totalorder %s16, 1
      %p41 = scmp.ne.s32.totalorder %s36, %s38
      %p42 = scmp.eq.s32.totalorder %s16, 0
      %p43 = por %p41, %p42
      %p44 = scmp.ne.s32.totalorder %s36, %s38
      %p45 = scmp.eq.s32.totalorder %s21, 1
      %p46 = por %p44, %p45
      %p47 = scmp.ne.s32.totalorder %s38, %s39
      %p48 = scmp.eq.s32.totalorder %s21, 0
      %p49 = por %p47, %p48
      %p50 = scmp.ne.s32.totalorder %s38, %s39
      %p51 = scmp.eq.s32.totalorder %s22, 1
      %p52 = por %p50, %p51
      %p54 = scmp.ne.s32.totalorder %s39, %s53
      %p55 = scmp.eq.s32.totalorder %s22, 0
      %p56 = por %p54, %p55
      %s58 = sadd.s32 %s57, 1
      %p61 = scmp.eq.s32.totalorder %s16, 1
      %p62 = scmp.ne.s32.totalorder %s57, %s59
      %p63 = scmp.eq.s32.totalorder %s16, 0
      %p64 = por %p62, %p63
      %p65 = scmp.ne.s32.totalorder %s57, %s59
      %p66 = scmp.eq.s32.totalorder %s21, 1
      %p67 = por %p65, %p66
      %p68 = scmp.ne.s32.totalorder %s59, %s60
      %p69 = scmp.eq.s32.totalorder %s21, 0
      %p70 = por %p68, %p69
      %p71 = scmp.ne.s32.totalorder %s59, %s60
      %p72 = scmp.eq.s32.totalorder %s22, 1
      %p73 = por %p71, %p72
      %p75 = scmp.ne.s32.totalorder %s60, %s74
      %p76 = scmp.eq.s32.totalorder %s22, 0
      %p77 = por %p75, %p76
      %s78 = ssub.s32 %s23, %s35
      %s79 = ssub.s32 %s24, %s31
      %s80 = sor.u32 %s78, %s79
      %p81 = scmp.eq.s32.totalorder %s80, 0
      %s83 = sadd.s32 %s82, 1
      %s84 = scalar_select %p81, %s82, %s83
      %p87 = pneg %p81
      %p88 = scmp.eq.s32.totalorder %s16, 1
      %p89 = por %p87, %p88
      %p90 = scmp.ne.s32.totalorder %s82, %s85
      %p91 = scmp.eq.s32.totalorder %s16, 0
      %p92 = por %p90, %p91
      %p93 = scmp.ne.s32.totalorder %s82, %s85
      %p94 = scmp.eq.s32.totalorder %s21, 1
      %p95 = por %p93, %p94
      %p96 = scmp.ne.s32.totalorder %s85, %s86
      %p97 = scmp.eq.s32.totalorder %s21, 0
      %p98 = por %p96, %p97
      %p99 = scmp.ne.s32.totalorder %s85, %s86
      %p100 = scmp.eq.s32.totalorder %s22, 1
      %p101 = por %p99, %p100
      %p103 = scmp.ne.s32.totalorder %s86, %s102
      %p104 = scmp.eq.s32.totalorder %s22, 0
      %p105 = por %p103, %p104
      %s107 = sadd.s32 %s106, 1
      %p110 = scmp.eq.s32.totalorder %s16, 1
      %p111 = scmp.ne.s32.totalorder %s106, %s108
      %p112 = scmp.eq.s32.totalorder %s16, 0
      %p113 = por %p111, %p112
      %p114 = scmp.ne.s32.totalorder %s106, %s108
      %p115 = scmp.eq.s32.totalorder %s21, 1
      %p116 = por %p114, %p115
      %p117 = scmp.ne.s32.totalorder %s108, %s109
      %p118 = scmp.eq.s32.totalorder %s21, 0
      %p119 = por %p117, %p118
      %p120 = scmp.ne.s32.totalorder %s108, %s109
      %p121 = scmp.eq.s32.totalorder %s22, 1
      %p122 = por %p120, %p121
      %p124 = scmp.ne.s32.totalorder %s109, %s123
      %p125 = scmp.eq.s32.totalorder %s22, 0
      %p126 = por %p124, %p125
      %s128 = sadd.s32 %s127, 1
      %p131 = scmp.eq.s32.totalorder %s16, 1
      %p132 = scmp.ne.s32.totalorder %s127, %s129
      %p133 = scmp.eq.s32.totalorder %s16, 0
      %p134 = por %p132, %p133
      %p135 = scmp.ne.s32.totalorder %s127, %s129
      %p136 = scmp.eq.s32.totalorder %s21, 1
      %p137 = por %p135, %p136
      %p138 = scmp.ne.s32.totalorder %s129, %s130
      %p139 = scmp.eq.s32.totalorder %s21, 0
      %p140 = por %p138, %p139
      %p141 = scmp.ne.s32.totalorder %s129, %s130
      %p142 = scmp.eq.s32.totalorder %s22, 1
      %p143 = por %p141, %p142
      %p145 = scmp.ne.s32.totalorder %s130, %s144
      %p146 = scmp.eq.s32.totalorder %s22, 0
      %p147 = por %p145, %p146
      %s148 = ssub.s32 %s23, %s35
      %s149 = ssub.s32 %s24, %s31
      %s150 = sor.u32 %s148, %s149
      %p151 = scmp.eq.s32.totalorder %s150, 0
      %s153 = sadd.s32 %s152, 1
      %s154 = scalar_select %p151, %s152, %s153
      %p157 = pneg %p151
      %p158 = scmp.eq.s32.totalorder %s16, 1
      %p159 = por %p157, %p158
      %p160 = scmp.ne.s32.totalorder %s152, %s155
      %p161 = scmp.eq.s32.totalorder %s16, 0
      %p162 = por %p160, %p161
      %p163 = scmp.ne.s32.totalorder %s152, %s155
      %p164 = scmp.eq.s32.totalorder %s21, 1
      %p165 = por %p163, %p164
      %p166 = scmp.ne.s32.totalorder %s155, %s156
      %p167 = scmp.eq.s32.totalorder %s21, 0
      %p168 = por %p166, %p167
      %p169 = scmp.ne.s32.totalorder %s155, %s156
      %p170 = scmp.eq.s32.totalorder %s22, 1
      %p171 = por %p169, %p170
      %p173 = scmp.ne.s32.totalorder %s156, %s172
      %p174 = scmp.eq.s32.totalorder %s22, 0
      %p175 = por %p173, %p174
      %p176 = scmp.le.s32.totalorder 1, %s16
      %p177 = scmp.lt.s32.totalorder %s16, 3
      %p178 = pnand %p176, %p177
      %p179 = pneg %p178
      // Predicated region
      $region9: #{_model_forward.2} parent=5 // pred_check
        _
      $region10: #{_model_forward.2} parent=5 // pred_check_branch
        %181 = sbr.rel (%p178) target = $region12
      $region11: #{_model_forward.2} parent=5 // pred_region
        %s182 = ssub.s32 %s16, 1
        // Predicated region
        $region13: #{_model_forward.2} parent=11 // pred_check
          %p183 = pneg %p49
        $region14: #{_model_forward.2} parent=11 // pred_check_branch
          %185 = sbr.rel (%p183) target = $region16
        $region15: #{_model_forward.2} parent=11 // pred_region
          %s187 = ssub.s32 64, 64
          %188 = vsyncadd [#allocation4], %s187
          %s190 = sshll.u32 %s0, 4
          %s191 = int_to_ptr.vmem [resolvable:$true] %s190
          %193 = dma.vmem_to_smem %s191, 64, [#allocation2], [#allocation4]
        $region16: #{_model_forward.2} parent=11 // pred_fallthru
          _
        // Predicated region
        $region17: #{_model_forward.2} parent=11 // pred_check
          %p194 = pneg %p70
        $region18: #{_model_forward.2} parent=11 // pred_check_branch
          %196 = sbr.rel (%p194) target = $region20
        $region19: #{_model_forward.2} parent=11 // pred_region
          %s198 = ssub.s32 16, 16
          %199 = vsyncadd [#allocation6], %s198
          %s201 = sshll.u32 %s1, 4
          %s202 = int_to_ptr.vmem [resolvable:$true] %s201
          %204 = dma.vmem_to_smem %s202, 16, [#allocation5], [#allocation6]
        $region20: #{_model_forward.2} parent=11 // pred_fallthru
          _
        // Predicated region
        $region21: #{_model_forward.2} parent=11 // pred_check
          %p205 = pneg %p119
        $region22: #{_model_forward.2} parent=11 // pred_check_branch
          %207 = sbr.rel (%p205) target = $region24
        $region23: #{_model_forward.2} parent=11 // pred_region
          _
        $region24: #{_model_forward.2} parent=11 // pred_fallthru
          _
        // Predicated region
        $region25: #{_model_forward.2} parent=11 // pred_check
          %p208 = pneg %p140
        $region26: #{_model_forward.2} parent=11 // pred_check_branch
          %210 = sbr.rel (%p208) target = $region28
        $region27: #{_model_forward.2} parent=11 // pred_region
          _
        $region28: #{_model_forward.2} parent=11 // pred_fallthru
          _
      $region12: #{_model_forward.2} parent=5 // pred_fallthru
        _
      %p211 = scmp.lt.s32.totalorder %s16, 2
      // Predicated region
      $region29: #{_model_forward.2} parent=5 // pred_check
        %p212 = pneg %p211
      $region30: #{_model_forward.2} parent=5 // pred_check_branch
        %214 = sbr.rel (%p212) target = $region32
      $region31: #{_model_forward.2} parent=5 // pred_region
        // Predicated region
        $region33: #{_model_forward.2} parent=31 // pred_check
          %p215 = pneg %p92
        $region34: #{_model_forward.2} parent=31 // pred_check_branch
          %217 = sbr.rel (%p215) target = $region36
        $region35: #{_model_forward.2} parent=31 // pred_region
          %s218 = sand.u32 %s82, 1
          %s219 = scalar_lea.sflag [#allocation3], %s218
          %s220 = sand.u32 %s82, 1
          %s221 = smul.addr %s220, 48
          %s222 = scalar_lea.vmem [#allocation7], %s221
          %s223 = smul.u32 2, %s24
          %s225 = ssub.s32 768, 768
          %226 = vsyncadd %s219, %s225
          %s227 = smul.addr %s23, 6
          %s228 = sadd.s32 %s223, %s227
          %s229 = smul.addr %s228, 128
          %s230 = scalar_lea.hbm %s2, %s229
          %s231 = sshll.u32 %s222, 4
          %s232 = int_to_ptr.vmem [resolvable:$true] %s231
          %237 = dma.hbm_to_vmem [thread:$0]  %s230, 768, %s232, %s219, 128, 128, 8
        $region36: #{_model_forward.2} parent=31 // pred_fallthru
          _
      $region32: #{_model_forward.2} parent=5 // pred_fallthru
        _
      %p238 = scmp.le.s32.totalorder 1, %s16
      %p239 = scmp.lt.s32.totalorder %s16, 3
      %p240 = pnand %p238, %p239
      %p241 = pneg %p240
      // Predicated region
      $region37: #{_model_forward.2} parent=5 // pred_check
        _
      $region38: #{_model_forward.2} parent=5 // pred_check_branch
        %243 = sbr.rel (%p240) target = $region40
      $region39: #{_model_forward.2} parent=5 // pred_region
        %s244 = ssub.s32 %s16, 1
        // Predicated region
        $region41: #{_model_forward.2} parent=39 // pred_check
          %p245 = pneg %p49
        $region42: #{_model_forward.2} parent=39 // pred_check_branch
          %247 = sbr.rel (%p245) target = $region44
        $region43: #{_model_forward.2} parent=39 // pred_region
          %248 = dma.done [#allocation4], 64
        $region44: #{_model_forward.2} parent=39 // pred_fallthru
          _
        // Predicated region
        $region45: #{_model_forward.2} parent=39 // pred_check
          %p249 = pneg %p70
        $region46: #{_model_forward.2} parent=39 // pred_check_branch
          %251 = sbr.rel (%p249) target = $region48
        $region47: #{_model_forward.2} parent=39 // pred_region
          %252 = dma.done [#allocation6], 16
        $region48: #{_model_forward.2} parent=39 // pred_fallthru
          _
        %s253 = sand.u32 %s85, 1
        %s254 = scalar_lea.sflag [#allocation3], %s253
        %s255 = sand.u32 %s85, 1
        %s256 = smul.addr %s255, 48
        %s257 = scalar_lea.vmem [#allocation7], %s256
        // Predicated region
        $region49: #{_model_forward.2} parent=39 // pred_check
          %p258 = pneg %p98
        $region50: #{_model_forward.2} parent=39 // pred_check_branch
          %260 = sbr.rel (%p258) target = $region52
        $region51: #{_model_forward.2} parent=39 // pred_region
          %261 = dma.done %s254, 768
        $region52: #{_model_forward.2} parent=39 // pred_fallthru
          _
        %262 = sfence
        %p263 = pneg %p49
        %p264 = pneg %p46
        %p265 = pneg %p70
        %p266 = pneg %p67
        %s267 = sand.u32 %s85, 1
        %s268 = scalar_lea.sflag [#allocation3], %s267
        %s269 = sand.u32 %s85, 1
        %s270 = smul.addr %s269, 48
        %s271 = scalar_lea.vmem [#allocation7], %s270
        %p272 = pneg %p98
        %p273 = pneg %p95
        %p274 = pneg %p119
        %p275 = pneg %p116
        %p276 = pneg %p140
        %p277 = pneg %p137
        %p278 = pneg %p168
        %p279 = pneg %p165
        %p280 = scmp.lt.s32.totalorder %s25, 1
        %s281 = scalar_select %p280, %s25, 1
        %p282 = scmp.lt.s32.totalorder %s26, 0
        %s283 = scalar_select %p282, %s26, 0
        %s284 = smul.addr %s281, 6
        %s285 = sadd.s32 %s283, %s284
        %s286 = smul.addr %s285, 4
        %s287 = scalar_lea.vmem %s5, %s286
        %s288 = smul.u32 2, %s26
        %p289 = scmp.lt.s32.totalorder %s25, 1
        %s290 = scalar_select %p289, %s25, 1
        %p291 = scmp.lt.s32.totalorder %s26, 0
        %s292 = scalar_select %p291, %s26, 0
        %s293 = smul.addr %s290, 6
        %s294 = sadd.s32 %s292, %s293
        %s295 = smul.addr %s294, 4
        %s296 = scalar_lea.vmem %s5, %s295
        %v297 = vld [vmem:[%s3] sm:$0xf]
        %v298 = vld [vmem:[%s4] sm:$0xff]
        %v299 = vld [vmem:[%s4 + $0x8] sm:$0xff]
        %v300 = vld [vmem:[%s257] sm:$0xff]
        %v301 = vld [vmem:[%s257 + $0x8] sm:$0xff]
        %vm302 = vcmask 130048
        %v304 = vsel %vm302, %v297, 0
        %306 = vmatprep.subr.mxu0 0.0
        %307 = vmatpush1.msra.mxu0 0.0
        %308 = vmatprep.subr.mxu0 0.0
        %309 = vmatpush1.msra.mxu0 0.0
        %310 = vmatprep.subr.mxu0 0.0
        %311 = vmatpush1.msra.mxu0 0.0
        %312 = vmatprep.subr.mxu0 0.0
        %313 = vmatpush1.msra.mxu0 0.0
        %314 = vmatprep.subr.mxu0 0.0
        %315 = vmatpush1.msra.mxu0 0.0
        %316 = vmatprep.subr.mxu0 0.0
        %317 = vmatpush1.msra.mxu0 0.0
        %318 = vmatprep.subr.mxu0 0.0
        %319 = vmatpush1.msra.mxu0 0.0
        %320 = vmatprep.subr.mxu0 0.0
        %321 = vmatpush1.msra.mxu0 0.0
        %322 = vmatprep.subr.mxu0 0.0
        %323 = vmatpush1.msra.mxu0 0.0
        %324 = vmatprep.subr.mxu0 0.0
        %325 = vmatpush1.msra.mxu0 0.0
        %326 = vmatprep.subr.mxu0 0.0
        %327 = vmatpush1.msra.mxu0 0.0
        %328 = vmatprep.subr.mxu0 0.0
        %329 = vmatpush1.msra.mxu0 0.0
        %330 = vmatprep.subr.mxu0 0.0
        %331 = vmatpush1.msra.mxu0 0.0
        %332 = vmatprep.subr.mxu0 0.0
        %333 = vmatpush1.msra.mxu0 0.0
        %334 = vmatprep.subr.mxu0 0.0
        %335 = vmatpush1.msra.mxu0 %v301
        %336 = vmatprep.subr.mxu0 0.0
        %337 = vmatpush1.msra.mxu0 %v300
        %338 = vmatprep.subr.mxu0 0.0
        %339 = vmatpush2.msra.mxu0 0.0
        %340 = vmatprep.subr.mxu0 0.0
        %341 = vmatpush2.msra.mxu0 0.0
        %342 = vmatprep.subr.mxu0 0.0
        %343 = vmatpush2.msra.mxu0 0.0
        %344 = vmatprep.subr.mxu0 0.0
        %345 = vmatpush2.msra.mxu0 0.0
        %346 = vmatprep.subr.mxu0 0.0
        %347 = vmatpush2.msra.mxu0 0.0
        %348 = vmatprep.subr.mxu0 0.0
        %349 = vmatpush2.msra.mxu0 0.0
        %350 = vmatprep.subr.mxu0 0.0
        %351 = vmatpush2.msra.mxu0 0.0
        %352 = vmatprep.subr.mxu0 0.0
        %353 = vmatpush2.msra.mxu0 0.0
        %354 = vmatprep.subr.mxu0 0.0
        %355 = vmatpush2.msra.mxu0 0.0
        %356 = vmatprep.subr.mxu0 0.0
        %357 = vmatpush2.msra.mxu0 0.0
        %358 = vmatprep.subr.mxu0 0.0
        %359 = vmatpush2.msra.mxu0 0.0
        %360 = vmatprep.subr.mxu0 0.0
        %361 = vmatpush2.msra.mxu0 0.0
        %362 = vmatprep.subr.mxu0 0.0
        %363 = vmatpush2.msra.mxu0 0.0
        %364 = vmatprep.subr.mxu0 0.0
        %365 = vmatpush2.msra.mxu0 0.0
        %366 = vmatprep.subr.mxu0 0.0
        %367 = vmatpush2.msra.mxu0 0.0
        %368 = vmatprep.subr.mxu0 0.0
        %369 = vmatpush2.msra.mxu0 0.0
        %370 = vmatprep.mubr.f32.mxu0 0.0
        %371 = vmatmul.mubr.f32.gmra.mxu0 %v304
        %v372 = vpop.f32.mrf.mxu0
        %v373 = vadd.f32 0.0, %v372
        %v374 = vpop.f32.mrf.mxu0
        %375 = vdwg.mxu0
        %v377 = vsel %vm302, %v373, 0
        %379 = vmatprep.subr.mxu0 0.0
        %380 = vmatpush1.msra.mxu0 0.0
        %381 = vmatprep.subr.mxu0 0.0
        %382 = vmatpush1.msra.mxu0 0.0
        %383 = vmatprep.subr.mxu0 0.0
        %384 = vmatpush1.msra.mxu0 0.0
        %385 = vmatprep.subr.mxu0 0.0
        %386 = vmatpush1.msra.mxu0 0.0
        %387 = vmatprep.subr.mxu0 0.0
        %388 = vmatpush1.msra.mxu0 0.0
        %389 = vmatprep.subr.mxu0 0.0
        %390 = vmatpush1.msra.mxu0 0.0
        %391 = vmatprep.subr.mxu0 0.0
        %392 = vmatpush1.msra.mxu0 0.0
        %393 = vmatprep.subr.mxu0 0.0
        %394 = vmatpush1.msra.mxu0 0.0
        %395 = vmatprep.subr.mxu0 0.0
        %396 = vmatpush1.msra.mxu0 0.0
        %397 = vmatprep.subr.mxu0 0.0
        %398 = vmatpush1.msra.mxu0 0.0
        %399 = vmatprep.subr.mxu0 0.0
        %400 = vmatpush1.msra.mxu0 0.0
        %401 = vmatprep.subr.mxu0 0.0
        %402 = vmatpush1.msra.mxu0 0.0
        %403 = vmatprep.subr.mxu0 0.0
        %404 = vmatpush1.msra.mxu0 0.0
        %405 = vmatprep.subr.mxu0 0.0
        %406 = vmatpush1.msra.mxu0 0.0
        %407 = vmatprep.subr.mxu0 0.0
        %408 = vmatpush1.msra.mxu0 %v299
        %409 = vmatprep.subr.mxu0 0.0
        %410 = vmatpush1.msra.mxu0 %v298
        %411 = vmatprep.subr.mxu0 0.0
        %412 = vmatpush2.msra.mxu0 0.0
        %413 = vmatprep.subr.mxu0 0.0
        %414 = vmatpush2.msra.mxu0 0.0
        %415 = vmatprep.subr.mxu0 0.0
        %416 = vmatpush2.msra.mxu0 0.0
        %417 = vmatprep.subr.mxu0 0.0
        %418 = vmatpush2.msra.mxu0 0.0
        %419 = vmatprep.subr.mxu0 0.0
        %420 = vmatpush2.msra.mxu0 0.0
        %421 = vmatprep.subr.mxu0 0.0
        %422 = vmatpush2.msra.mxu0 0.0
        %423 = vmatprep.subr.mxu0 0.0
        %424 = vmatpush2.msra.mxu0 0.0
        %425 = vmatprep.subr.mxu0 0.0
        %426 = vmatpush2.msra.mxu0 0.0
        %427 = vmatprep.subr.mxu0 0.0
        %428 = vmatpush2.msra.mxu0 0.0
        %429 = vmatprep.subr.mxu0 0.0
        %430 = vmatpush2.msra.mxu0 0.0
        %431 = vmatprep.subr.mxu0 0.0
        %432 = vmatpush2.msra.mxu0 0.0
        %433 = vmatprep.subr.mxu0 0.0
        %434 = vmatpush2.msra.mxu0 0.0
        %435 = vmatprep.subr.mxu0 0.0
        %436 = vmatpush2.msra.mxu0 0.0
        %437 = vmatprep.subr.mxu0 0.0
        %438 = vmatpush2.msra.mxu0 0.0
        %439 = vmatprep.subr.mxu0 0.0
        %440 = vmatpush2.msra.mxu0 0.0
        %441 = vmatprep.subr.mxu0 0.0
        %442 = vmatpush2.msra.mxu0 0.0
        %443 = vmatprep.mubr.f32.mxu0 0.0
        %444 = vmatmul.mubr.f32.gmra.mxu0 %v377
        %v445 = vpop.f32.mrf.mxu0
        %v446 = vadd.f32 0.0, %v445
        %v447 = vpop.f32.mrf.mxu0
        %448 = vdwg.mxu0
        %s449 = scalar_lea.vmem %s257, 16 [#allocation7]
        %v450 = vld [vmem:[%s449] sm:$0xff]
        %v451 = vld [vmem:[%s449 + $0x8] sm:$0xff]
        %452 = vmatprep.subr.mxu0 0.0
        %453 = vmatpush1.msra.mxu0 0.0
        %454 = vmatprep.subr.mxu0 0.0
        %455 = vmatpush1.msra.mxu0 0.0
        %456 = vmatprep.subr.mxu0 0.0
        %457 = vmatpush1.msra.mxu0 0.0
        %458 = vmatprep.subr.mxu0 0.0
        %459 = vmatpush1.msra.mxu0 0.0
        %460 = vmatprep.subr.mxu0 0.0
        %461 = vmatpush1.msra.mxu0 0.0
        %462 = vmatprep.subr.mxu0 0.0
        %463 = vmatpush1.msra.mxu0 0.0
        %464 = vmatprep.subr.mxu0 0.0
        %465 = vmatpush1.msra.mxu0 0.0
        %466 = vmatprep.subr.mxu0 0.0
        %467 = vmatpush1.msra.mxu0 0.0
        %468 = vmatprep.subr.mxu0 0.0
        %469 = vmatpush1.msra.mxu0 0.0
        %470 = vmatprep.subr.mxu0 0.0
        %471 = vmatpush1.msra.mxu0 0.0
        %472 = vmatprep.subr.mxu0 0.0
        %473 = vmatpush1.msra.mxu0 0.0
        %474 = vmatprep.subr.mxu0 0.0
        %475 = vmatpush1.msra.mxu0 0.0
        %476 = vmatprep.subr.mxu0 0.0
        %477 = vmatpush1.msra.mxu0 0.0
        %478 = vmatprep.subr.mxu0 0.0
        %479 = vmatpush1.msra.mxu0 0.0
        %480 = vmatprep.subr.mxu0 0.0
        %481 = vmatpush1.msra.mxu0 %v451
        %482 = vmatprep.subr.mxu0 0.0
        %483 = vmatpush1.msra.mxu0 %v450
        %484 = vmatprep.subr.mxu0 0.0
        %485 = vmatpush2.msra.mxu0 0.0
        %486 = vmatprep.subr.mxu0 0.0
        %487 = vmatpush2.msra.mxu0 0.0
        %488 = vmatprep.subr.mxu0 0.0
        %489 = vmatpush2.msra.mxu0 0.0
        %490 = vmatprep.subr.mxu0 0.0
        %491 = vmatpush2.msra.mxu0 0.0
        %492 = vmatprep.subr.mxu0 0.0
        %493 = vmatpush2.msra.mxu0 0.0
        %494 = vmatprep.subr.mxu0 0.0
        %495 = vmatpush2.msra.mxu0 0.0
        %496 = vmatprep.subr.mxu0 0.0
        %497 = vmatpush2.msra.mxu0 0.0
        %498 = vmatprep.subr.mxu0 0.0
        %499 = vmatpush2.msra.mxu0 0.0
        %500 = vmatprep.subr.mxu0 0.0
        %501 = vmatpush2.msra.mxu0 0.0
        %502 = vmatprep.subr.mxu0 0.0
        %503 = vmatpush2.msra.mxu0 0.0
        %504 = vmatprep.subr.mxu0 0.0
        %505 = vmatpush2.msra.mxu0 0.0
        %506 = vmatprep.subr.mxu0 0.0
        %507 = vmatpush2.msra.mxu0 0.0
        %508 = vmatprep.subr.mxu0 0.0
        %509 = vmatpush2.msra.mxu0 0.0
        %510 = vmatprep.subr.mxu0 0.0
        %511 = vmatpush2.msra.mxu0 0.0
        %512 = vmatprep.subr.mxu0 0.0
        %513 = vmatpush2.msra.mxu0 0.0
        %514 = vmatprep.subr.mxu0 0.0
        %515 = vmatpush2.msra.mxu0 0.0
        %516 = vmatprep.mubr.f32.mxu0 0.0
        %517 = vmatmul.mubr.f32.gmra.mxu0 %v304
        %v518 = vpop.f32.mrf.mxu0
        %v519 = vadd.f32 0.0, %v518
        %v520 = vpop.f32.mrf.mxu0
        %521 = vdwg.mxu0
        %v523 = vsel %vm302, %v519, 0
        %525 = vmatprep.subr.mxu0 0.0
        %526 = vmatpush1.msra.mxu0 0.0
        %527 = vmatprep.subr.mxu0 0.0
        %528 = vmatpush1.msra.mxu0 0.0
        %529 = vmatprep.subr.mxu0 0.0
        %530 = vmatpush1.msra.mxu0 0.0
        %531 = vmatprep.subr.mxu0 0.0
        %532 = vmatpush1.msra.mxu0 0.0
        %533 = vmatprep.subr.mxu0 0.0
        %534 = vmatpush1.msra.mxu0 0.0
        %535 = vmatprep.subr.mxu0 0.0
        %536 = vmatpush1.msra.mxu0 0.0
        %537 = vmatprep.subr.mxu0 0.0
        %538 = vmatpush1.msra.mxu0 0.0
        %539 = vmatprep.subr.mxu0 0.0
        %540 = vmatpush1.msra.mxu0 0.0
        %541 = vmatprep.subr.mxu0 0.0
        %542 = vmatpush1.msra.mxu0 0.0
        %543 = vmatprep.subr.mxu0 0.0
        %544 = vmatpush1.msra.mxu0 0.0
        %545 = vmatprep.subr.mxu0 0.0
        %546 = vmatpush1.msra.mxu0 0.0
        %547 = vmatprep.subr.mxu0 0.0
        %548 = vmatpush1.msra.mxu0 0.0
        %549 = vmatprep.subr.mxu0 0.0
        %550 = vmatpush1.msra.mxu0 0.0
        %551 = vmatprep.subr.mxu0 0.0
        %552 = vmatpush1.msra.mxu0 0.0
        %553 = vmatprep.subr.mxu0 0.0
        %554 = vmatpush1.msra.mxu0 %v299
        %555 = vmatprep.subr.mxu0 0.0
        %556 = vmatpush1.msra.mxu0 %v298
        %557 = vmatprep.subr.mxu0 0.0
        %558 = vmatpush2.msra.mxu0 0.0
        %559 = vmatprep.subr.mxu0 0.0
        %560 = vmatpush2.msra.mxu0 0.0
        %561 = vmatprep.subr.mxu0 0.0
        %562 = vmatpush2.msra.mxu0 0.0
        %563 = vmatprep.subr.mxu0 0.0
        %564 = vmatpush2.msra.mxu0 0.0
        %565 = vmatprep.subr.mxu0 0.0
        %566 = vmatpush2.msra.mxu0 0.0
        %567 = vmatprep.subr.mxu0 0.0
        %568 = vmatpush2.msra.mxu0 0.0
        %569 = vmatprep.subr.mxu0 0.0
        %570 = vmatpush2.msra.mxu0 0.0
        %571 = vmatprep.subr.mxu0 0.0
        %572 = vmatpush2.msra.mxu0 0.0
        %573 = vmatprep.subr.mxu0 0.0
        %574 = vmatpush2.msra.mxu0 0.0
        %575 = vmatprep.subr.mxu0 0.0
        %576 = vmatpush2.msra.mxu0 0.0
        %577 = vmatprep.subr.mxu0 0.0
        %578 = vmatpush2.msra.mxu0 0.0
        %579 = vmatprep.subr.mxu0 0.0
        %580 = vmatpush2.msra.mxu0 0.0
        %581 = vmatprep.subr.mxu0 0.0
        %582 = vmatpush2.msra.mxu0 0.0
        %583 = vmatprep.subr.mxu0 0.0
        %584 = vmatpush2.msra.mxu0 0.0
        %585 = vmatprep.subr.mxu0 0.0
        %586 = vmatpush2.msra.mxu0 0.0
        %587 = vmatprep.subr.mxu0 0.0
        %588 = vmatpush2.msra.mxu0 0.0
        %589 = vmatprep.mubr.f32.mxu0 0.0
        %590 = vmatmul.mubr.f32.gmra.mxu0 %v523
        %v591 = vpop.f32.mrf.mxu0
        %v592 = vadd.f32 0.0, %v591
        %v593 = vpop.f32.mrf.mxu0
        %594 = vdwg.mxu0
        %s595 = scalar_lea.vmem %s257, 32 [#allocation7]
        %v596 = vld [vmem:[%s595] sm:$0xff]
        %v597 = vld [vmem:[%s595 + $0x8] sm:$0xff]
        %598 = vmatprep.subr.mxu0 0.0
        %599 = vmatpush1.msra.mxu0 0.0
        %600 = vmatprep.subr.mxu0 0.0
        %601 = vmatpush1.msra.mxu0 0.0
        %602 = vmatprep.subr.mxu0 0.0
        %603 = vmatpush1.msra.mxu0 0.0
        %604 = vmatprep.subr.mxu0 0.0
        %605 = vmatpush1.msra.mxu0 0.0
        %606 = vmatprep.subr.mxu0 0.0
        %607 = vmatpush1.msra.mxu0 0.0
        %608 = vmatprep.subr.mxu0 0.0
        %609 = vmatpush1.msra.mxu0 0.0
        %610 = vmatprep.subr.mxu0 0.0
        %611 = vmatpush1.msra.mxu0 0.0
        %612 = vmatprep.subr.mxu0 0.0
        %613 = vmatpush1.msra.mxu0 0.0
        %614 = vmatprep.subr.mxu0 0.0
        %615 = vmatpush1.msra.mxu0 0.0
        %616 = vmatprep.subr.mxu0 0.0
        %617 = vmatpush1.msra.mxu0 0.0
        %618 = vmatprep.subr.mxu0 0.0
        %619 = vmatpush1.msra.mxu0 0.0
        %620 = vmatprep.subr.mxu0 0.0
        %621 = vmatpush1.msra.mxu0 0.0
        %622 = vmatprep.subr.mxu0 0.0
        %623 = vmatpush1.msra.mxu0 0.0
        %624 = vmatprep.subr.mxu0 0.0
        %625 = vmatpush1.msra.mxu0 0.0
        %626 = vmatprep.subr.mxu0 0.0
        %627 = vmatpush1.msra.mxu0 %v597
        %628 = vmatprep.subr.mxu0 0.0
        %629 = vmatpush1.msra.mxu0 %v596
        %630 = vmatprep.subr.mxu0 0.0
        %631 = vmatpush2.msra.mxu0 0.0
        %632 = vmatprep.subr.mxu0 0.0
        %633 = vmatpush2.msra.mxu0 0.0
        %634 = vmatprep.subr.mxu0 0.0
        %635 = vmatpush2.msra.mxu0 0.0
        %636 = vmatprep.subr.mxu0 0.0
        %637 = vmatpush2.msra.mxu0 0.0
        %638 = vmatprep.subr.mxu0 0.0
        %639 = vmatpush2.msra.mxu0 0.0
        %640 = vmatprep.subr.mxu0 0.0
        %641 = vmatpush2.msra.mxu0 0.0
        %642 = vmatprep.subr.mxu0 0.0
        %643 = vmatpush2.msra.mxu0 0.0
        %644 = vmatprep.subr.mxu0 0.0
        %645 = vmatpush2.msra.mxu0 0.0
        %646 = vmatprep.subr.mxu0 0.0
        %647 = vmatpush2.msra.mxu0 0.0
        %648 = vmatprep.subr.mxu0 0.0
        %649 = vmatpush2.msra.mxu0 0.0
        %650 = vmatprep.subr.mxu0 0.0
        %651 = vmatpush2.msra.mxu0 0.0
        %652 = vmatprep.subr.mxu0 0.0
        %653 = vmatpush2.msra.mxu0 0.0
        %654 = vmatprep.subr.mxu0 0.0
        %655 = vmatpush2.msra.mxu0 0.0
        %656 = vmatprep.subr.mxu0 0.0
        %657 = vmatpush2.msra.mxu0 0.0
        %658 = vmatprep.subr.mxu0 0.0
        %659 = vmatpush2.msra.mxu0 0.0
        %660 = vmatprep.subr.mxu0 0.0
        %661 = vmatpush2.msra.mxu0 0.0
        %662 = vmatprep.mubr.f32.mxu0 0.0
        %663 = vmatmul.mubr.f32.gmra.mxu0 %v304
        %v664 = vpop.f32.mrf.mxu0
        %v665 = vadd.f32 0.0, %v664
        %v666 = vpop.f32.mrf.mxu0
        %667 = vdwg.mxu0
        %v669 = vsel %vm302, %v665, 0
        %671 = vmatprep.subr.mxu0 0.0
        %672 = vmatpush1.msra.mxu0 0.0
        %673 = vmatprep.subr.mxu0 0.0
        %674 = vmatpush1.msra.mxu0 0.0
        %675 = vmatprep.subr.mxu0 0.0
        %676 = vmatpush1.msra.mxu0 0.0
        %677 = vmatprep.subr.mxu0 0.0
        %678 = vmatpush1.msra.mxu0 0.0
        %679 = vmatprep.subr.mxu0 0.0
        %680 = vmatpush1.msra.mxu0 0.0
        %681 = vmatprep.subr.mxu0 0.0
        %682 = vmatpush1.msra.mxu0 0.0
        %683 = vmatprep.subr.mxu0 0.0
        %684 = vmatpush1.msra.mxu0 0.0
        %685 = vmatprep.subr.mxu0 0.0
        %686 = vmatpush1.msra.mxu0 0.0
        %687 = vmatprep.subr.mxu0 0.0
        %688 = vmatpush1.msra.mxu0 0.0
        %689 = vmatprep.subr.mxu0 0.0
        %690 = vmatpush1.msra.mxu0 0.0
        %691 = vmatprep.subr.mxu0 0.0
        %692 = vmatpush1.msra.mxu0 0.0
        %693 = vmatprep.subr.mxu0 0.0
        %694 = vmatpush1.msra.mxu0 0.0
        %695 = vmatprep.subr.mxu0 0.0
        %696 = vmatpush1.msra.mxu0 0.0
        %697 = vmatprep.subr.mxu0 0.0
        %698 = vmatpush1.msra.mxu0 0.0
        %699 = vmatprep.subr.mxu0 0.0
        %700 = vmatpush1.msra.mxu0 %v299
        %701 = vmatprep.subr.mxu0 0.0
        %702 = vmatpush1.msra.mxu0 %v298
        %703 = vmatprep.subr.mxu0 0.0
        %704 = vmatpush2.msra.mxu0 0.0
        %705 = vmatprep.subr.mxu0 0.0
        %706 = vmatpush2.msra.mxu0 0.0
        %707 = vmatprep.subr.mxu0 0.0
        %708 = vmatpush2.msra.mxu0 0.0
        %709 = vmatprep.subr.mxu0 0.0
        %710 = vmatpush2.msra.mxu0 0.0
        %711 = vmatprep.subr.mxu0 0.0
        %712 = vmatpush2.msra.mxu0 0.0
        %713 = vmatprep.subr.mxu0 0.0
        %714 = vmatpush2.msra.mxu0 0.0
        %715 = vmatprep.subr.mxu0 0.0
        %716 = vmatpush2.msra.mxu0 0.0
        %717 = vmatprep.subr.mxu0 0.0
        %718 = vmatpush2.msra.mxu0 0.0
        %719 = vmatprep.subr.mxu0 0.0
        %720 = vmatpush2.msra.mxu0 0.0
        %721 = vmatprep.subr.mxu0 0.0
        %722 = vmatpush2.msra.mxu0 0.0
        %723 = vmatprep.subr.mxu0 0.0
        %724 = vmatpush2.msra.mxu0 0.0
        %725 = vmatprep.subr.mxu0 0.0
        %726 = vmatpush2.msra.mxu0 0.0
        %727 = vmatprep.subr.mxu0 0.0
        %728 = vmatpush2.msra.mxu0 0.0
        %729 = vmatprep.subr.mxu0 0.0
        %730 = vmatpush2.msra.mxu0 0.0
        %731 = vmatprep.subr.mxu0 0.0
        %732 = vmatpush2.msra.mxu0 0.0
        %733 = vmatprep.subr.mxu0 0.0
        %734 = vmatpush2.msra.mxu0 0.0
        %735 = vmatprep.mubr.f32.mxu0 0.0
        %736 = vmatmul.mubr.f32.gmra.mxu0 %v669
        %v737 = vpop.f32.mrf.mxu0
        %v738 = vadd.f32 0.0, %v737
        %v739 = vpop.f32.mrf.mxu0
        %740 = vdwg.mxu0
        %s741 = sld [smem:[#allocation2]]
        %v742 = vstv %s741
        %v743 = vmul.f32 %v446, %v742
        %s744 = sld [smem:[#allocation2 + $0x80]]
        %v745 = vstv %s744
        %v746 = vmul.f32 %v592, %v745
        %v747 = vadd.f32 %v743, %v746
        %s748 = sld [smem:[#allocation2 + $0x100]]
        %v749 = vstv %s748
        %v750 = vmul.f32 %v738, %v749
        %v751 = vadd.f32 %v747, %v750
        %s752 = sld [smem:[#allocation5]]
        %v753 = vstv %s752
        %v754 = vadd.f32 %v751, %v753
        %vm755 = vcmask 27648
        %756 = vst.msk [vmem:[%s296] sm:$0xf] %vm755, %v754
        %s757 = sld [smem:[#allocation2 + $0x1]]
        %v758 = vstv %s757
        %v759 = vmul.f32 %v446, %v758
        %s760 = sld [smem:[#allocation2 + $0x81]]
        %v761 = vstv %s760
        %v762 = vmul.f32 %v592, %v761
        %v763 = vadd.f32 %v759, %v762
        %s764 = sld [smem:[#allocation2 + $0x101]]
        %v765 = vstv %s764
        %v766 = vmul.f32 %v738, %v765
        %v767 = vadd.f32 %v763, %v766
        %s768 = sld [smem:[#allocation5 + $0x1]]
        %v769 = vstv %s768
        %v770 = vadd.f32 %v767, %v769
        %s771 = scalar_lea.vmem %s296, 4
        %772 = vst.msk [vmem:[%s771] sm:$0xf] %vm755, %v770
        %s773 = sld [smem:[#allocation2 + $0x2]]
        %v774 = vstv %s773
        %v775 = vmul.f32 %v446, %v774
        %s776 = sld [smem:[#allocation2 + $0x82]]
        %v777 = vstv %s776
        %v778 = vmul.f32 %v592, %v777
        %v779 = vadd.f32 %v775, %v778
        %s780 = sld [smem:[#allocation2 + $0x102]]
        %v781 = vstv %s780
        %v782 = vmul.f32 %v738, %v781
        %v783 = vadd.f32 %v779, %v782
        %s784 = sld [smem:[#allocation5 + $0x2]]
        %v785 = vstv %s784
        %v786 = vadd.f32 %v783, %v785
        %s787 = scalar_lea.vmem %s296, 8
        %788 = vst.msk [vmem:[%s787] sm:$0xf] %vm755, %v786
        %s789 = sld [smem:[#allocation2 + $0x3]]
        %v790 = vstv %s789
        %v791 = vmul.f32 %v446, %v790
        %s792 = sld [smem:[#allocation2 + $0x83]]
        %v793 = vstv %s792
        %v794 = vmul.f32 %v592, %v793
        %v795 = vadd.f32 %v791, %v794
        %s796 = sld [smem:[#allocation2 + $0x103]]
        %v797 = vstv %s796
        %v798 = vmul.f32 %v738, %v797
        %v799 = vadd.f32 %v795, %v798
        %s800 = sld [smem:[#allocation5 + $0x3]]
        %v801 = vstv %s800
        %v802 = vadd.f32 %v799, %v801
        %s803 = scalar_lea.vmem %s296, 12
        %804 = vst.msk [vmem:[%s803] sm:$0xf] %vm755, %v802
        %s805 = sld [smem:[#allocation2 + $0x4]]
        %v806 = vstv %s805
        %v807 = vmul.f32 %v446, %v806
        %s808 = sld [smem:[#allocation2 + $0x84]]
        %v809 = vstv %s808
        %v810 = vmul.f32 %v592, %v809
        %v811 = vadd.f32 %v807, %v810
        %s812 = sld [smem:[#allocation2 + $0x104]]
        %v813 = vstv %s812
        %v814 = vmul.f32 %v738, %v813
        %v815 = vadd.f32 %v811, %v814
        %s816 = sld [smem:[#allocation5 + $0x4]]
        %v817 = vstv %s816
        %v818 = vadd.f32 %v815, %v817
        %s819 = scalar_lea.vmem %s296, 16
        %820 = vst.msk [vmem:[%s819] sm:$0xf] %vm755, %v818
        %s821 = sld [smem:[#allocation2 + $0x5]]
        %v822 = vstv %s821
        %v823 = vmul.f32 %v446, %v822
        %s824 = sld [smem:[#allocation2 + $0x85]]
        %v825 = vstv %s824
        %v826 = vmul.f32 %v592, %v825
        %v827 = vadd.f32 %v823, %v826
        %s828 = sld [smem:[#allocation2 + $0x105]]
        %v829 = vstv %s828
        %v830 = vmul.f32 %v738, %v829
        %v831 = vadd.f32 %v827, %v830
        %s832 = sld [smem:[#allocation5 + $0x5]]
        %v833 = vstv %s832
        %v834 = vadd.f32 %v831, %v833
        %s835 = scalar_lea.vmem %s296, 20
        %836 = vst.msk [vmem:[%s835] sm:$0xf] %vm755, %v834
        %p837 = scmp.lt.s32.totalorder %s25, 1
        %s838 = scalar_select %p837, %s25, 1
        %p839 = scmp.lt.s32.totalorder %s26, 0
        %s840 = scalar_select %p839, %s26, 0
        %s841 = smul.addr %s838, 6
        %s842 = sadd.s32 %s840, %s841
        %s843 = smul.addr %s842, 4
        %s844 = scalar_lea.vmem %s5, %s843
        // Predicated region
        $region53: #{_model_forward.2} parent=39 // pred_check
          %p845 = pneg %p165
        $region54: #{_model_forward.2} parent=39 // pred_check_branch
          %847 = sbr.rel (%p845) target = $region56
        $region55: #{_model_forward.2} parent=39 // pred_region
          _
        $region56: #{_model_forward.2} parent=39 // pred_fallthru
          _
      $region40: #{_model_forward.2} parent=5 // pred_fallthru
        _
      %p848 = scmp.le.s32.totalorder 2, %s16
      // Predicated region
      $region57: #{_model_forward.2} parent=5 // pred_check
        %p849 = pneg %p848
      $region58: #{_model_forward.2} parent=5 // pred_check_branch
        %851 = sbr.rel (%p849) target = $region60
      $region59: #{_model_forward.2} parent=5 // pred_region
        %s852 = ssub.s32 %s16, 2
        // Predicated region
        $region61: #{_model_forward.2} parent=59 // pred_check
          %p853 = pneg %p171
        $region62: #{_model_forward.2} parent=59 // pred_check_branch
          %855 = sbr.rel (%p853) target = $region64
        $region63: #{_model_forward.2} parent=59 // pred_region
          %p856 = scmp.lt.s32.totalorder %s27, 1
          %s857 = scalar_select %p856, %s27, 1
          %p858 = scmp.lt.s32.totalorder %s28, 0
          %s859 = scalar_select %p858, %s28, 0
          %s860 = smul.addr %s857, 6
          %s861 = sadd.s32 %s859, %s860
          %s862 = smul.addr %s861, 4
          %s863 = scalar_lea.vmem %s5, %s862
        $region64: #{_model_forward.2} parent=59 // pred_fallthru
          _
      $region60: #{_model_forward.2} parent=5 // pred_fallthru
        _
    $region6: #{_model_forward.2} parent=1 // loop_footer
      %s20 = sadd.s32 1, %s16
    $region7: #{_model_forward.2} parent=1 // loop_footer_branch
      %15 = sbr.rel target = $region3
    $region8: #{_model_forward.2} parent=1 // loop_exit
      _
    %864 = vsyncpa [#allocation3], 1
    %s865 = scalar_lea.sflag [#allocation3], 1
    %866 = vsyncpa %s865, 1
    %867 = vsyncpa [#allocation4], 1
    %s868 = scalar_lea.sflag [#allocation4], 1
    %869 = vsyncpa %s868, 1
    %870 = vsyncpa [#allocation6], 1

</llo_original>
